<compile_context>
chip_gen: v7x
topology: tpu7x:2x2x1
jax: 0.10.0
libtpu: 0.0.40
codegen_flags: <defaults>
</compile_context>

<pallas_src>
import jax
import jax.numpy as jnp
from jax.experimental import pallas as pl
from jax.experimental.pallas import tpu as pltpu


def _linear_bias_residual_kernel(x_ref, w_ref, b_ref, r_ref, o_ref):
    """One M-tile: full-K matmul on the MXU, fused bias + residual add."""
    # In-kernel bf16 cast: cheap VPU pack, MXU still runs its native bf16 path,
    # and x only crosses HBM once (as f32).
    x_bf16 = x_ref[...].astype(jnp.bfloat16)
    acc = jnp.dot(x_bf16, w_ref[...], preferred_element_type=jnp.float32)
    # Dropout(p=0.1) in eval mode is the identity.
    # TODO(synk): training-mode dropout (random mask + 1/(1-p) scaling) not
    # implemented; PyTorch eval-mode dropout is the identity, matched here.
    o_ref[...] = (acc + b_ref[...] + r_ref[...].astype(jnp.float32)).astype(
        o_ref.dtype
    )


def prepare_linear_params(w, b):
    """One-time parameter prep (do at init/load time, NOT per call).

    PyTorch Linear weight is [out, in]; store transposed [in, out] in bf16 so
    the per-call path never pays a weight-conversion pass. Bias stays f32.
    """
    return jnp.transpose(w).astype(jnp.bfloat16), b.reshape(1, -1).astype(jnp.float32)


def _pick_tm(M):
    """Tile rows per grid step: one step on single-TC chips (v5e/v6e),
    one tile per TensorCore on dual-TC v7x."""
    kind = ""
    try:
        kind = jax.devices()[0].device_kind.lower()
    except Exception:
        pass
    num_tc = 2 if "v7" in kind else 1
    tm = pl.cdiv(M, num_tc)
    tm = min(tm, 384)               # cap tile rows; VMEM use stays tiny
    tm = ((tm + 7) // 8) * 8        # sublane alignment for the block shape
    return max(tm, 8)


def linear_dropout_add(x, w_t_bf16, b2, residual, *, tm=None):
    """x: [B, S, K] f32, w_t_bf16: [K, N] bf16, b2: [1, N] f32,
    residual: [B, S, N] -> [B, S, N] in residual.dtype."""
    B, S, K = x.shape
    N = w_t_bf16.shape[1]
    M = B * S

    x2 = x.reshape(M, K)           # stays f32; cast happens inside the kernel
    r2 = residual.reshape(M, N)    # native dtype, no wrapper cast pass

    if tm is None:
        tm = _pick_tm(M)
    num_tiles = pl.cdiv(M, tm)     # ragged last block handled by Pallas (no jnp.pad)

    r_bytes = r2.dtype.itemsize
    cost = pl.CostEstimate(
        flops=2 * M * K * N,
        transcendentals=0,
        bytes_accessed=(
            M * K * x2.dtype.itemsize   # x (f32)
            + K * N * 2                 # weight (bf16), fetched once
            + N * 4                     # bias (f32)
            + M * N * r_bytes           # residual
            + M * N * r_bytes           # output
        ),
    )

    out = pl.pallas_call(
        _linear_bias_residual_kernel,
        out_shape=jax.ShapeDtypeStruct((M, N), residual.dtype),
        grid_spec=pltpu.PrefetchScalarGridSpec(
            num_scalar_prefetch=0,
            grid=(num_tiles,),
            in_specs=[
                pl.BlockSpec((tm, K), lambda i: (i, 0)),   # x tile (full K)
                pl.BlockSpec((K, N), lambda i: (0, 0)),    # full weight, constant index
                pl.BlockSpec((1, N), lambda i: (0, 0)),    # bias (replicated)
                pl.BlockSpec((tm, N), lambda i: (i, 0)),   # residual tile
            ],
            out_specs=pl.BlockSpec((tm, N), lambda i: (i, 0)),
        ),
        compiler_params=pltpu.CompilerParams(
            dimension_semantics=("parallel",),
            vmem_limit_bytes=32 * 1024 * 1024,
        ),
        cost_estimate=cost,
    )(x2, w_t_bf16, b2, r2)

    return out.reshape(B, S, N)


if __name__ == "__main__":
    IN_FEATURES = 1024
    OUT_FEATURES = 256
    B, S = 1, 384

    key = jax.random.PRNGKey(0)
    k1, k2, k3, k4 = jax.random.split(key, 4)

    # Deterministic synthetic parameters (PyTorch Linear weight is [out, in]).
    w = jax.random.normal(k1, (OUT_FEATURES, IN_FEATURES), jnp.float32) * 0.02
    b = jax.random.normal(k2, (OUT_FEATURES,), jnp.float32) * 0.02

    # One-time parameter prep, hoisted out of the per-call path.
    w_t_bf16, b2 = jax.block_until_ready(prepare_linear_params(w, b))

    # Inputs matching the module's forward: x529 [1,384,1024], x527 [1,384,256]
    x529 = jax.random.normal(k3, (B, S, IN_FEATURES), jnp.float32)
    x527 = jax.random.normal(k4, (B, S, OUT_FEATURES), jnp.float32)

    out = linear_dropout_add(x529, w_t_bf16, b2, x527)
    out = jax.block_until_ready(out)

    # Reference checks in plain JAX: same bf16 matmul path (tight tolerance)
    # and full-f32 path (loose tolerance). Eval-mode dropout = identity.
    ref_bf16 = (
        jnp.einsum(
            "bsk,kn->bsn",
            x529.astype(jnp.bfloat16),
            w_t_bf16,
            preferred_element_type=jnp.float32,
        )
        + b
        + x527
    )
    ref_f32 = jnp.einsum("bsk,kn->bsn", x529, jnp.transpose(w)) + b + x527

    assert out.shape == (B, S, OUT_FEATURES)
    assert out.dtype == x527.dtype
    assert jnp.allclose(out, ref_bf16, atol=1e-2, rtol=1e-2)
    assert jnp.allclose(out, ref_f32, atol=5e-2, rtol=5e-2)

    print("KERNEL_OK")
</pallas_src>

<mosaic_0001>
module attributes {stable_mosaic.version = 11 : i64} {
  func.func @_linear_bias_residual_kernel(%arg0: i32, %arg1: memref<384x1024xf32, #tpu.memory_space<vmem>>, %arg2: memref<1024x256xbf16, #tpu.memory_space<vmem>>, %arg3: memref<1x256xf32, #tpu.memory_space<vmem>>, %arg4: memref<384x256xf32, #tpu.memory_space<vmem>>, %arg5: memref<384x256xf32, #tpu.memory_space<vmem>>) attributes {dimension_semantics = [#tpu.dimension_semantics<parallel>], iteration_bounds = array<i64: 1>, scalar_prefetch = 0 : i64, scratch_operands = 0 : i64, tpu.core_type = #tpu.core_type<tc>, window_params = [{transform_indices = @transform_0, window_bounds = array<i64: 384, 1024>}, {pipeline_mode = #tpu.pipeline_mode<synchronous>, transform_indices = @transform_1, window_bounds = array<i64: 1024, 256>}, {pipeline_mode = #tpu.pipeline_mode<synchronous>, transform_indices = @transform_2, window_bounds = array<i64: 1, 256>}, {transform_indices = @transform_3, window_bounds = array<i64: 384, 256>}, {transform_indices = @transform_4, window_bounds = array<i64: 384, 256>}]} {
    %c0 = arith.constant 0 : index
    %c0_0 = arith.constant 0 : index
    %0 = vector.load %arg1[%c0, %c0_0] : memref<384x1024xf32, #tpu.memory_space<vmem>>, vector<384x1024xf32>
    %1 = arith.truncf %0 : vector<384x1024xf32> to vector<384x1024xbf16>
    %c0_1 = arith.constant 0 : index
    %c0_2 = arith.constant 0 : index
    %2 = vector.load %arg2[%c0_1, %c0_2] : memref<1024x256xbf16, #tpu.memory_space<vmem>>, vector<1024x256xbf16>
    %cst = arith.constant dense<0.000000e+00> : vector<384x256xf32>
    %3 = tpu.matmul %1, %2, %cst {dimension_numbers = #tpu.dot_dimension_numbers<[1], [0], [0], [1], [0, 0, 1, 1], [], []>} : vector<384x1024xbf16>, vector<1024x256xbf16>, vector<384x256xf32> -> vector<384x256xf32>
    %c0_3 = arith.constant 0 : index
    %c0_4 = arith.constant 0 : index
    %4 = vector.load %arg3[%c0_3, %c0_4] : memref<1x256xf32, #tpu.memory_space<vmem>>, vector<1x256xf32>
    %5 = vector.broadcast %4 : vector<1x256xf32> to vector<384x256xf32>
    %6 = arith.addf %3, %5 : vector<384x256xf32>
    %c0_5 = arith.constant 0 : index
    %c0_6 = arith.constant 0 : index
    %7 = vector.load %arg4[%c0_5, %c0_6] : memref<384x256xf32, #tpu.memory_space<vmem>>, vector<384x256xf32>
    %8 = arith.addf %6, %7 : vector<384x256xf32>
    %c0_7 = arith.constant 0 : index
    %c0_8 = arith.constant 0 : index
    %9 = vector.load %arg5[%c0_7, %c0_8] : memref<384x256xf32, #tpu.memory_space<vmem>>, vector<384x256xf32>
    tpu.vector_store %arg5[%c0_7, %c0_8], %8 {strides = array<i32>} : memref<384x256xf32, #tpu.memory_space<vmem>>, vector<384x256xf32>,
    return
  }
  func.func @transform_0(%arg0: i32) -> (i32, i32) {
    %c0_i32 = arith.constant 0 : i32
    %c0_i32_0 = arith.constant 0 : i32
    return %arg0, %c0_i32 : i32, i32
  }
  func.func @transform_1(%arg0: i32) -> (i32, i32) {
    %c0_i32 = arith.constant 0 : i32
    %c0_i32_0 = arith.constant 0 : i32
    %c0_i32_1 = arith.constant 0 : i32
    return %c0_i32, %c0_i32_0 : i32, i32
  }
  func.func @transform_2(%arg0: i32) -> (i32, i32) {
    %c0_i32 = arith.constant 0 : i32
    %c0_i32_0 = arith.constant 0 : i32
    %c0_i32_1 = arith.constant 0 : i32
    return %c0_i32, %c0_i32_0 : i32, i32
  }
  func.func @transform_3(%arg0: i32) -> (i32, i32) {
    %c0_i32 = arith.constant 0 : i32
    %c0_i32_0 = arith.constant 0 : i32
    return %arg0, %c0_i32 : i32, i32
  }
  func.func @transform_4(%arg0: i32) -> (i32, i32) {
    %c0_i32 = arith.constant 0 : i32
    %c0_i32_0 = arith.constant 0 : i32
    return %arg0, %c0_i32 : i32, i32
  }
}

</mosaic_0001>

<llo_original>
// kernel: tpu_custom_call.1
$region0: #{tpu_custom_call.1}
  #allocation0 [shape = 'u32[]', space=smem, size = 0x4, offset = 0x4, fixed_abs, tag = 'smem constant byte address 0x4 - core index']
  #allocation1 [shape = 'u32[144,128]{1,0:T(1,128)}', space=vmem, size = 0x12000, scoped, tag = 'internal scratch']
  %s0 = inlined_call_operand.hbm [shape: f32[384,1024], index: 0, kind: input, shape index: {}]
  %s1 = inlined_call_operand.hbm [shape: bf16[1024,256], index: 1, kind: input, shape index: {}]
  %s2 = inlined_call_operand.hbm [shape: f32[1,256], index: 2, kind: input, shape index: {}]
  %s3 = inlined_call_operand.hbm [shape: f32[384,256], index: 3, kind: input, shape index: {}]
  %s4 = inlined_call_operand.hbm [shape: f32[384,256], index: 4, kind: output, shape index: {}]
  %s5 = sld [smem:[#allocation0]]
  $region42: #{tpu_custom_call.1} parent=0
    _
  %s7 = ssub.s32 1, %s5
  %s8 = scalar_select 0, %s7, %s5
  $region1: #{tpu_custom_call.1} parent=0
    #allocation2 [shape = 'u8[1572864]{0}', space=vmem, size = 0x180000, scoped, tag = 'input window, operand 0, single buffered']
    #allocation3 [shape = 's32[1]{0}', space=sflag, size = 0x4, scoped, tag = 'scoped memory for tpu_custom_call.1']
    #allocation4 [shape = 's32[1]{0}', space=sflag, size = 0x4, scoped, tag = 'scoped memory for tpu_custom_call.1']
    #allocation5 [shape = 'u8[524288]{0}', space=vmem, size = 0x80000, scoped, tag = 'input window, operand 1, single buffered']
    #allocation6 [shape = 's32[1]{0}', space=sflag, size = 0x4, scoped, tag = 'scoped memory for tpu_custom_call.1']
    #allocation7 [shape = 'u8[1024]{0}', space=vmem, size = 0x400, scoped, tag = 'input window, operand 2, single buffered']
    #allocation8 [shape = 'u8[393216]{0}', space=vmem, size = 0x60000, scoped, tag = 'input window, operand 3, single buffered']
    #allocation9 [shape = 's32[1]{0}', space=sflag, size = 0x4, scoped, tag = 'scoped memory for tpu_custom_call.1']
    #allocation10 [shape = 'u8[393216]{0}', space=vmem, size = 0x60000, scoped, tag = 'output window, operand 0, single buffered']
    %9 = vsyncpa [#allocation3], 0
    %10 = vsyncpa [#allocation6], 0
    %11 = vsyncpa [#allocation9], 0
    %12 = vsyncpa [#allocation4], 0
    // Predicated region
    $region2: #{tpu_custom_call.1} parent=1 // pred_check
      _
    $region3: #{tpu_custom_call.1} parent=1 // pred_check_branch
      %14 = sbr.rel (0) target = $region5
    $region4: #{tpu_custom_call.1} parent=1 // pred_region
      %s16 = ssub.s32 49152, 49152
      %17 = vsyncadd [#allocation3], %s16
      %s18 = sshll.u32 [#allocation2], 4
      %s19 = int_to_ptr.vmem [resolvable:$true] %s18
      %24 = dma.hbm_to_vmem [thread:$0]  %s0, 49152, %s19, [#allocation3], 1024, 1024, 64
    $region5: #{tpu_custom_call.1} parent=1 // pred_fallthru
      _
    // Predicated region
    $region6: #{tpu_custom_call.1} parent=1 // pred_check
      _
    $region7: #{tpu_custom_call.1} parent=1 // pred_check_branch
      %26 = sbr.rel (0) target = $region9
    $region8: #{tpu_custom_call.1} parent=1 // pred_region
      %s28 = ssub.s32 16384, 16384
      %29 = vsyncadd [#allocation6], %s28
      %s30 = sshll.u32 [#allocation5], 4
      %s31 = int_to_ptr.vmem [resolvable:$true] %s30
      %36 = dma.hbm_to_vmem [thread:$0]  %s1, 16384, %s31, [#allocation6], 128, 128, 8
    $region9: #{tpu_custom_call.1} parent=1 // pred_fallthru
      _
    // Predicated region
    $region10: #{tpu_custom_call.1} parent=1 // pred_check
      _
    $region11: #{tpu_custom_call.1} parent=1 // pred_check_branch
      %38 = sbr.rel (0) target = $region13
    $region12: #{tpu_custom_call.1} parent=1 // pred_region
      %s40 = ssub.s32 32, 32
      %41 = vsyncadd [#allocation6], %s40
      %s43 = sshll.u32 [#allocation7], 4
      %s44 = int_to_ptr.vmem [resolvable:$true] %s43
      %46 = dma.hbm_to_vmem [thread:$0]  %s2, 32, %s44, [#allocation6]
    $region13: #{tpu_custom_call.1} parent=1 // pred_fallthru
      _
    // Predicated region
    $region14: #{tpu_custom_call.1} parent=1 // pred_check
      _
    $region15: #{tpu_custom_call.1} parent=1 // pred_check_branch
      %48 = sbr.rel (0) target = $region17
    $region16: #{tpu_custom_call.1} parent=1 // pred_region
      %s50 = ssub.s32 12288, 12288
      %51 = vsyncadd [#allocation9], %s50
      %s52 = sshll.u32 [#allocation8], 4
      %s53 = int_to_ptr.vmem [resolvable:$true] %s52
      %58 = dma.hbm_to_vmem [thread:$0]  %s3, 12288, %s53, [#allocation9], 256, 256, 16
    $region17: #{tpu_custom_call.1} parent=1 // pred_fallthru
      _
    // Predicated region
    $region18: #{tpu_custom_call.1} parent=1 // pred_check
      _
    $region19: #{tpu_custom_call.1} parent=1 // pred_check_branch
      %60 = sbr.rel (0) target = $region21
    $region20: #{tpu_custom_call.1} parent=1 // pred_region
      %61 = dma.done [#allocation3], 49152
    $region21: #{tpu_custom_call.1} parent=1 // pred_fallthru
      _
    // Predicated region
    $region22: #{tpu_custom_call.1} parent=1 // pred_check
      _
    $region23: #{tpu_custom_call.1} parent=1 // pred_check_branch
      %63 = sbr.rel (0) target = $region25
    $region24: #{tpu_custom_call.1} parent=1 // pred_region
      %64 = dma.done [#allocation6], 16384
    $region25: #{tpu_custom_call.1} parent=1 // pred_fallthru
      _
    // Predicated region
    $region26: #{tpu_custom_call.1} parent=1 // pred_check
      _
    $region27: #{tpu_custom_call.1} parent=1 // pred_check_branch
      %66 = sbr.rel (0) target = $region29
    $region28: #{tpu_custom_call.1} parent=1 // pred_region
      %67 = dma.done [#allocation6], 32
    $region29: #{tpu_custom_call.1} parent=1 // pred_fallthru
      _
    // Predicated region
    $region30: #{tpu_custom_call.1} parent=1 // pred_check
      _
    $region31: #{tpu_custom_call.1} parent=1 // pred_check_branch
      %69 = sbr.rel (0) target = $region33
    $region32: #{tpu_custom_call.1} parent=1 // pred_region
      %70 = dma.done [#allocation9], 12288
    $region33: #{tpu_custom_call.1} parent=1 // pred_fallthru
      _
    %v71 = vld [vmem:[#allocation2] sm:$0xff]
    %v72 = vld [vmem:[#allocation2 + $0x8] sm:$0xff]
    %v73 = vld [vmem:[#allocation2 + $0x10] sm:$0xff]
    %v74 = vld [vmem:[#allocation2 + $0x18] sm:$0xff]
    %v75 = vld [vmem:[#allocation2 + $0x20] sm:$0xff]
    %v76 = vld [vmem:[#allocation2 + $0x28] sm:$0xff]
    %v77 = vld [vmem:[#allocation2 + $0x30] sm:$0xff]
    %v78 = vld [vmem:[#allocation2 + $0x38] sm:$0xff]
    %v79 = vld [vmem:[#allocation2 + $0x40] sm:$0xff]
    %v80 = vld [vmem:[#allocation2 + $0x48] sm:$0xff]
    %v81 = vld [vmem:[#allocation2 + $0x50] sm:$0xff]
    %v82 = vld [vmem:[#allocation2 + $0x58] sm:$0xff]
    %v83 = vld [vmem:[#allocation2 + $0x60] sm:$0xff]
    %v84 = vld [vmem:[#allocation2 + $0x68] sm:$0xff]
    %v85 = vld [vmem:[#allocation2 + $0x70] sm:$0xff]
    %v86 = vld [vmem:[#allocation2 + $0x78] sm:$0xff]
    %v87 = vld [vmem:[#allocation2 + $0x80] sm:$0xff]
    %v88 = vld [vmem:[#allocation2 + $0x88] sm:$0xff]
    %v89 = vld [vmem:[#allocation2 + $0x90] sm:$0xff]
    %v90 = vld [vmem:[#allocation2 + $0x98] sm:$0xff]
    %v91 = vld [vmem:[#allocation2 + $0xa0] sm:$0xff]
    %v92 = vld [vmem:[#allocation2 + $0xa8] sm:$0xff]
    %v93 = vld [vmem:[#allocation2 + $0xb0] sm:$0xff]
    %v94 = vld [vmem:[#allocation2 + $0xb8] sm:$0xff]
    %v95 = vld [vmem:[#allocation2 + $0xc0] sm:$0xff]
    %v96 = vld [vmem:[#allocation2 + $0xc8] sm:$0xff]
    %v97 = vld [vmem:[#allocation2 + $0xd0] sm:$0xff]
    %v98 = vld [vmem:[#allocation2 + $0xd8] sm:$0xff]
    %v99 = vld [vmem:[#allocation2 + $0xe0] sm:$0xff]
    %v100 = vld [vmem:[#allocation2 + $0xe8] sm:$0xff]
    %v101 = vld [vmem:[#allocation2 + $0xf0] sm:$0xff]
    %v102 = vld [vmem:[#allocation2 + $0xf8] sm:$0xff]
    %v103 = vld [vmem:[#allocation2 + $0x100] sm:$0xff]
    %v104 = vld [vmem:[#allocation2 + $0x108] sm:$0xff]
    %v105 = vld [vmem:[#allocation2 + $0x110] sm:$0xff]
    %v106 = vld [vmem:[#allocation2 + $0x118] sm:$0xff]
    %v107 = vld [vmem:[#allocation2 + $0x120] sm:$0xff]
    %v108 = vld [vmem:[#allocation2 + $0x128] sm:$0xff]
    %v109 = vld [vmem:[#allocation2 + $0x130] sm:$0xff]
    %v110 = vld [vmem:[#allocation2 + $0x138] sm:$0xff]
    %v111 = vld [vmem:[#allocation2 + $0x140] sm:$0xff]
    %v112 = vld [vmem:[#allocation2 + $0x148] sm:$0xff]
    %v113 = vld [vmem:[#allocation2 + $0x150] sm:$0xff]
    %v114 = vld [vmem:[#allocation2 + $0x158] sm:$0xff]
    %v115 = vld [vmem:[#allocation2 + $0x160] sm:$0xff]
    %v116 = vld [vmem:[#allocation2 + $0x168] sm:$0xff]
    %v117 = vld [vmem:[#allocation2 + $0x170] sm:$0xff]
    %v118 = vld [vmem:[#allocation2 + $0x178] sm:$0xff]
    %v119 = vld [vmem:[#allocation2 + $0x180] sm:$0xff]
    %v120 = vld [vmem:[#allocation2 + $0x188] sm:$0xff]
    %v121 = vld [vmem:[#allocation2 + $0x190] sm:$0xff]
    %v122 = vld [vmem:[#allocation2 + $0x198] sm:$0xff]
    %v123 = vld [vmem:[#allocation2 + $0x1a0] sm:$0xff]
    %v124 = vld [vmem:[#allocation2 + $0x1a8] sm:$0xff]
    %v125 = vld [vmem:[#allocation2 + $0x1b0] sm:$0xff]
    %v126 = vld [vmem:[#allocation2 + $0x1b8] sm:$0xff]
    %v127 = vld [vmem:[#allocation2 + $0x1c0] sm:$0xff]
    %v128 = vld [vmem:[#allocation2 + $0x1c8] sm:$0xff]
    %v129 = vld [vmem:[#allocation2 + $0x1d0] sm:$0xff]
    %v130 = vld [vmem:[#allocation2 + $0x1d8] sm:$0xff]
    %v131 = vld [vmem:[#allocation2 + $0x1e0] sm:$0xff]
    %v132 = vld [vmem:[#allocation2 + $0x1e8] sm:$0xff]
    %v133 = vld [vmem:[#allocation2 + $0x1f0] sm:$0xff]
    %v134 = vld [vmem:[#allocation2 + $0x1f8] sm:$0xff]
    %v135 = vld [vmem:[#allocation2 + $0x200] sm:$0xff]
    %v136 = vld [vmem:[#allocation2 + $0x208] sm:$0xff]
    %v137 = vld [vmem:[#allocation2 + $0x210] sm:$0xff]
    %v138 = vld [vmem:[#allocation2 + $0x218] sm:$0xff]
    %v139 = vld [vmem:[#allocation2 + $0x220] sm:$0xff]
    %v140 = vld [vmem:[#allocation2 + $0x228] sm:$0xff]
    %v141 = vld [vmem:[#allocation2 + $0x230] sm:$0xff]
    %v142 = vld [vmem:[#allocation2 + $0x238] sm:$0xff]
    %v143 = vld [vmem:[#allocation2 + $0x240] sm:$0xff]
    %v144 = vld [vmem:[#allocation2 + $0x248] sm:$0xff]
    %v145 = vld [vmem:[#allocation2 + $0x250] sm:$0xff]
    %v146 = vld [vmem:[#allocation2 + $0x258] sm:$0xff]
    %v147 = vld [vmem:[#allocation2 + $0x260] sm:$0xff]
    %v148 = vld [vmem:[#allocation2 + $0x268] sm:$0xff]
    %v149 = vld [vmem:[#allocation2 + $0x270] sm:$0xff]
    %v150 = vld [vmem:[#allocation2 + $0x278] sm:$0xff]
    %v151 = vld [vmem:[#allocation2 + $0x280] sm:$0xff]
    %v152 = vld [vmem:[#allocation2 + $0x288] sm:$0xff]
    %v153 = vld [vmem:[#allocation2 + $0x290] sm:$0xff]
    %v154 = vld [vmem:[#allocation2 + $0x298] sm:$0xff]
    %v155 = vld [vmem:[#allocation2 + $0x2a0] sm:$0xff]
    %v156 = vld [vmem:[#allocation2 + $0x2a8] sm:$0xff]
    %v157 = vld [vmem:[#allocation2 + $0x2b0] sm:$0xff]
    %v158 = vld [vmem:[#allocation2 + $0x2b8] sm:$0xff]
    %v159 = vld [vmem:[#allocation2 + $0x2c0] sm:$0xff]
    %v160 = vld [vmem:[#allocation2 + $0x2c8] sm:$0xff]
    %v161 = vld [vmem:[#allocation2 + $0x2d0] sm:$0xff]
    %v162 = vld [vmem:[#allocation2 + $0x2d8] sm:$0xff]
    %v163 = vld [vmem:[#allocation2 + $0x2e0] sm:$0xff]
    %v164 = vld [vmem:[#allocation2 + $0x2e8] sm:$0xff]
    %v165 = vld [vmem:[#allocation2 + $0x2f0] sm:$0xff]
    %v166 = vld [vmem:[#allocation2 + $0x2f8] sm:$0xff]
    %v167 = vld [vmem:[#allocation2 + $0x300] sm:$0xff]
    %v168 = vld [vmem:[#allocation2 + $0x308] sm:$0xff]
    %v169 = vld [vmem:[#allocation2 + $0x310] sm:$0xff]
    %v170 = vld [vmem:[#allocation2 + $0x318] sm:$0xff]
    %v171 = vld [vmem:[#allocation2 + $0x320] sm:$0xff]
    %v172 = vld [vmem:[#allocation2 + $0x328] sm:$0xff]
    %v173 = vld [vmem:[#allocation2 + $0x330] sm:$0xff]
    %v174 = vld [vmem:[#allocation2 + $0x338] sm:$0xff]
    %v175 = vld [vmem:[#allocation2 + $0x340] sm:$0xff]
    %v176 = vld [vmem:[#allocation2 + $0x348] sm:$0xff]
    %v177 = vld [vmem:[#allocation2 + $0x350] sm:$0xff]
    %v178 = vld [vmem:[#allocation2 + $0x358] sm:$0xff]
    %v179 = vld [vmem:[#allocation2 + $0x360] sm:$0xff]
    %v180 = vld [vmem:[#allocation2 + $0x368] sm:$0xff]
    %v181 = vld [vmem:[#allocation2 + $0x370] sm:$0xff]
    %v182 = vld [vmem:[#allocation2 + $0x378] sm:$0xff]
    %v183 = vld [vmem:[#allocation2 + $0x380] sm:$0xff]
    %v184 = vld [vmem:[#allocation2 + $0x388] sm:$0xff]
    %v185 = vld [vmem:[#allocation2 + $0x390] sm:$0xff]
    %v186 = vld [vmem:[#allocation2 + $0x398] sm:$0xff]
    %v187 = vld [vmem:[#allocation2 + $0x3a0] sm:$0xff]
    %v188 = vld [vmem:[#allocation2 + $0x3a8] sm:$0xff]
    %v189 = vld [vmem:[#allocation2 + $0x3b0] sm:$0xff]
    %v190 = vld [vmem:[#allocation2 + $0x3b8] sm:$0xff]
    %v191 = vld [vmem:[#allocation2 + $0x3c0] sm:$0xff]
    %v192 = vld [vmem:[#allocation2 + $0x3c8] sm:$0xff]
    %v193 = vld [vmem:[#allocation2 + $0x3d0] sm:$0xff]
    %v194 = vld [vmem:[#allocation2 + $0x3d8] sm:$0xff]
    %v195 = vld [vmem:[#allocation2 + $0x3e0] sm:$0xff]
    %v196 = vld [vmem:[#allocation2 + $0x3e8] sm:$0xff]
    %v197 = vld [vmem:[#allocation2 + $0x3f0] sm:$0xff]
    %v198 = vld [vmem:[#allocation2 + $0x3f8] sm:$0xff]
    %v199 = vld [vmem:[#allocation2 + $0x400] sm:$0xff]
    %v200 = vld [vmem:[#allocation2 + $0x408] sm:$0xff]
    %v201 = vld [vmem:[#allocation2 + $0x410] sm:$0xff]
    %v202 = vld [vmem:[#allocation2 + $0x418] sm:$0xff]
    %v203 = vld [vmem:[#allocation2 + $0x420] sm:$0xff]
    %v204 = vld [vmem:[#allocation2 + $0x428] sm:$0xff]
    %v205 = vld [vmem:[#allocation2 + $0x430] sm:$0xff]
    %v206 = vld [vmem:[#allocation2 + $0x438] sm:$0xff]
    %v207 = vld [vmem:[#allocation2 + $0x440] sm:$0xff]
    %v208 = vld [vmem:[#allocation2 + $0x448] sm:$0xff]
    %v209 = vld [vmem:[#allocation2 + $0x450] sm:$0xff]
    %v210 = vld [vmem:[#allocation2 + $0x458] sm:$0xff]
    %v211 = vld [vmem:[#allocation2 + $0x460] sm:$0xff]
    %v212 = vld [vmem:[#allocation2 + $0x468] sm:$0xff]
    %v213 = vld [vmem:[#allocation2 + $0x470] sm:$0xff]
    %v214 = vld [vmem:[#allocation2 + $0x478] sm:$0xff]
    %v215 = vld [vmem:[#allocation2 + $0x480] sm:$0xff]
    %v216 = vld [vmem:[#allocation2 + $0x488] sm:$0xff]
    %v217 = vld [vmem:[#allocation2 + $0x490] sm:$0xff]
    %v218 = vld [vmem:[#allocation2 + $0x498] sm:$0xff]
    %v219 = vld [vmem:[#allocation2 + $0x4a0] sm:$0xff]
    %v220 = vld [vmem:[#allocation2 + $0x4a8] sm:$0xff]
    %v221 = vld [vmem:[#allocation2 + $0x4b0] sm:$0xff]
    %v222 = vld [vmem:[#allocation2 + $0x4b8] sm:$0xff]
    %v223 = vld [vmem:[#allocation2 + $0x4c0] sm:$0xff]
    %v224 = vld [vmem:[#allocation2 + $0x4c8] sm:$0xff]
    %v225 = vld [vmem:[#allocation2 + $0x4d0] sm:$0xff]
    %v226 = vld [vmem:[#allocation2 + $0x4d8] sm:$0xff]
    %v227 = vld [vmem:[#allocation2 + $0x4e0] sm:$0xff]
    %v228 = vld [vmem:[#allocation2 + $0x4e8] sm:$0xff]
    %v229 = vld [vmem:[#allocation2 + $0x4f0] sm:$0xff]
    %v230 = vld [vmem:[#allocation2 + $0x4f8] sm:$0xff]
    %v231 = vld [vmem:[#allocation2 + $0x500] sm:$0xff]
    %v232 = vld [vmem:[#allocation2 + $0x508] sm:$0xff]
    %v233 = vld [vmem:[#allocation2 + $0x510] sm:$0xff]
    %v234 = vld [vmem:[#allocation2 + $0x518] sm:$0xff]
    %v235 = vld [vmem:[#allocation2 + $0x520] sm:$0xff]
    %v236 = vld [vmem:[#allocation2 + $0x528] sm:$0xff]
    %v237 = vld [vmem:[#allocation2 + $0x530] sm:$0xff]
    %v238 = vld [vmem:[#allocation2 + $0x538] sm:$0xff]
    %v239 = vld [vmem:[#allocation2 + $0x540] sm:$0xff]
    %v240 = vld [vmem:[#allocation2 + $0x548] sm:$0xff]
    %v241 = vld [vmem:[#allocation2 + $0x550] sm:$0xff]
    %v242 = vld [vmem:[#allocation2 + $0x558] sm:$0xff]
    %v243 = vld [vmem:[#allocation2 + $0x560] sm:$0xff]
    %v244 = vld [vmem:[#allocation2 + $0x568] sm:$0xff]
    %v245 = vld [vmem:[#allocation2 + $0x570] sm:$0xff]
    %v246 = vld [vmem:[#allocation2 + $0x578] sm:$0xff]
    %v247 = vld [vmem:[#allocation2 + $0x580] sm:$0xff]
    %v248 = vld [vmem:[#allocation2 + $0x588] sm:$0xff]
    %v249 = vld [vmem:[#allocation2 + $0x590] sm:$0xff]
    %v250 = vld [vmem:[#allocation2 + $0x598] sm:$0xff]
    %v251 = vld [vmem:[#allocation2 + $0x5a0] sm:$0xff]
    %v252 = vld [vmem:[#allocation2 + $0x5a8] sm:$0xff]
    %v253 = vld [vmem:[#allocation2 + $0x5b0] sm:$0xff]
    %v254 = vld [vmem:[#allocation2 + $0x5b8] sm:$0xff]
    %v255 = vld [vmem:[#allocation2 + $0x5c0] sm:$0xff]
    %v256 = vld [vmem:[#allocation2 + $0x5c8] sm:$0xff]
    %v257 = vld [vmem:[#allocation2 + $0x5d0] sm:$0xff]
    %v258 = vld [vmem:[#allocation2 + $0x5d8] sm:$0xff]
    %v259 = vld [vmem:[#allocation2 + $0x5e0] sm:$0xff]
    %v260 = vld [vmem:[#allocation2 + $0x5e8] sm:$0xff]
    %v261 = vld [vmem:[#allocation2 + $0x5f0] sm:$0xff]
    %v262 = vld [vmem:[#allocation2 + $0x5f8] sm:$0xff]
    %v263 = vld [vmem:[#allocation2 + $0x600] sm:$0xff]
    %v264 = vld [vmem:[#allocation2 + $0x608] sm:$0xff]
    %v265 = vld [vmem:[#allocation2 + $0x610] sm:$0xff]
    %v266 = vld [vmem:[#allocation2 + $0x618] sm:$0xff]
    %v267 = vld [vmem:[#allocation2 + $0x620] sm:$0xff]
    %v268 = vld [vmem:[#allocation2 + $0x628] sm:$0xff]
    %v269 = vld [vmem:[#allocation2 + $0x630] sm:$0xff]
    %v270 = vld [vmem:[#allocation2 + $0x638] sm:$0xff]
    %v271 = vld [vmem:[#allocation2 + $0x640] sm:$0xff]
    %v272 = vld [vmem:[#allocation2 + $0x648] sm:$0xff]
    %v273 = vld [vmem:[#allocation2 + $0x650] sm:$0xff]
    %v274 = vld [vmem:[#allocation2 + $0x658] sm:$0xff]
    %v275 = vld [vmem:[#allocation2 + $0x660] sm:$0xff]
    %v276 = vld [vmem:[#allocation2 + $0x668] sm:$0xff]
    %v277 = vld [vmem:[#allocation2 + $0x670] sm:$0xff]
    %v278 = vld [vmem:[#allocation2 + $0x678] sm:$0xff]
    %v279 = vld [vmem:[#allocation2 + $0x680] sm:$0xff]
    %v280 = vld [vmem:[#allocation2 + $0x688] sm:$0xff]
    %v281 = vld [vmem:[#allocation2 + $0x690] sm:$0xff]
    %v282 = vld [vmem:[#allocation2 + $0x698] sm:$0xff]
    %v283 = vld [vmem:[#allocation2 + $0x6a0] sm:$0xff]
    %v284 = vld [vmem:[#allocation2 + $0x6a8] sm:$0xff]
    %v285 = vld [vmem:[#allocation2 + $0x6b0] sm:$0xff]
    %v286 = vld [vmem:[#allocation2 + $0x6b8] sm:$0xff]
    %v287 = vld [vmem:[#allocation2 + $0x6c0] sm:$0xff]
    %v288 = vld [vmem:[#allocation2 + $0x6c8] sm:$0xff]
    %v289 = vld [vmem:[#allocation2 + $0x6d0] sm:$0xff]
    %v290 = vld [vmem:[#allocation2 + $0x6d8] sm:$0xff]
    %v291 = vld [vmem:[#allocation2 + $0x6e0] sm:$0xff]
    %v292 = vld [vmem:[#allocation2 + $0x6e8] sm:$0xff]
    %v293 = vld [vmem:[#allocation2 + $0x6f0] sm:$0xff]
    %v294 = vld [vmem:[#allocation2 + $0x6f8] sm:$0xff]
    %v295 = vld [vmem:[#allocation2 + $0x700] sm:$0xff]
    %v296 = vld [vmem:[#allocation2 + $0x708] sm:$0xff]
    %v297 = vld [vmem:[#allocation2 + $0x710] sm:$0xff]
    %v298 = vld [vmem:[#allocation2 + $0x718] sm:$0xff]
    %v299 = vld [vmem:[#allocation2 + $0x720] sm:$0xff]
    %v300 = vld [vmem:[#allocation2 + $0x728] sm:$0xff]
    %v301 = vld [vmem:[#allocation2 + $0x730] sm:$0xff]
    %v302 = vld [vmem:[#allocation2 + $0x738] sm:$0xff]
    %v303 = vld [vmem:[#allocation2 + $0x740] sm:$0xff]
    %v304 = vld [vmem:[#allocation2 + $0x748] sm:$0xff]
    %v305 = vld [vmem:[#allocation2 + $0x750] sm:$0xff]
    %v306 = vld [vmem:[#allocation2 + $0x758] sm:$0xff]
    %v307 = vld [vmem:[#allocation2 + $0x760] sm:$0xff]
    %v308 = vld [vmem:[#allocation2 + $0x768] sm:$0xff]
    %v309 = vld [vmem:[#allocation2 + $0x770] sm:$0xff]
    %v310 = vld [vmem:[#allocation2 + $0x778] sm:$0xff]
    %v311 = vld [vmem:[#allocation2 + $0x780] sm:$0xff]
    %v312 = vld [vmem:[#allocation2 + $0x788] sm:$0xff]
    %v313 = vld [vmem:[#allocation2 + $0x790] sm:$0xff]
    %v314 = vld [vmem:[#allocation2 + $0x798] sm:$0xff]
    %v315 = vld [vmem:[#allocation2 + $0x7a0] sm:$0xff]
    %v316 = vld [vmem:[#allocation2 + $0x7a8] sm:$0xff]
    %v317 = vld [vmem:[#allocation2 + $0x7b0] sm:$0xff]
    %v318 = vld [vmem:[#allocation2 + $0x7b8] sm:$0xff]
    %v319 = vld [vmem:[#allocation2 + $0x7c0] sm:$0xff]
    %v320 = vld [vmem:[#allocation2 + $0x7c8] sm:$0xff]
    %v321 = vld [vmem:[#allocation2 + $0x7d0] sm:$0xff]
    %v322 = vld [vmem:[#allocation2 + $0x7d8] sm:$0xff]
    %v323 = vld [vmem:[#allocation2 + $0x7e0] sm:$0xff]
    %v324 = vld [vmem:[#allocation2 + $0x7e8] sm:$0xff]
    %v325 = vld [vmem:[#allocation2 + $0x7f0] sm:$0xff]
    %v326 = vld [vmem:[#allocation2 + $0x7f8] sm:$0xff]
    %v327 = vld [vmem:[#allocation2 + $0x800] sm:$0xff]
    %v328 = vld [vmem:[#allocation2 + $0x808] sm:$0xff]
    %v329 = vld [vmem:[#allocation2 + $0x810] sm:$0xff]
    %v330 = vld [vmem:[#allocation2 + $0x818] sm:$0xff]
    %v331 = vld [vmem:[#allocation2 + $0x820] sm:$0xff]
    %v332 = vld [vmem:[#allocation2 + $0x828] sm:$0xff]
    %v333 = vld [vmem:[#allocation2 + $0x830] sm:$0xff]
    %v334 = vld [vmem:[#allocation2 + $0x838] sm:$0xff]
    %v335 = vld [vmem:[#allocation2 + $0x840] sm:$0xff]
    %v336 = vld [vmem:[#allocation2 + $0x848] sm:$0xff]
    %v337 = vld [vmem:[#allocation2 + $0x850] sm:$0xff]
    %v338 = vld [vmem:[#allocation2 + $0x858] sm:$0xff]
    %v339 = vld [vmem:[#allocation2 + $0x860] sm:$0xff]
    %v340 = vld [vmem:[#allocation2 + $0x868] sm:$0xff]
    %v341 = vld [vmem:[#allocation2 + $0x870] sm:$0xff]
    %v342 = vld [vmem:[#allocation2 + $0x878] sm:$0xff]
    %v343 = vld [vmem:[#allocation2 + $0x880] sm:$0xff]
    %v344 = vld [vmem:[#allocation2 + $0x888] sm:$0xff]
    %v345 = vld [vmem:[#allocation2 + $0x890] sm:$0xff]
    %v346 = vld [vmem:[#allocation2 + $0x898] sm:$0xff]
    %v347 = vld [vmem:[#allocation2 + $0x8a0] sm:$0xff]
    %v348 = vld [vmem:[#allocation2 + $0x8a8] sm:$0xff]
    %v349 = vld [vmem:[#allocation2 + $0x8b0] sm:$0xff]
    %v350 = vld [vmem:[#allocation2 + $0x8b8] sm:$0xff]
    %v351 = vld [vmem:[#allocation2 + $0x8c0] sm:$0xff]
    %v352 = vld [vmem:[#allocation2 + $0x8c8] sm:$0xff]
    %v353 = vld [vmem:[#allocation2 + $0x8d0] sm:$0xff]
    %v354 = vld [vmem:[#allocation2 + $0x8d8] sm:$0xff]
    %v355 = vld [vmem:[#allocation2 + $0x8e0] sm:$0xff]
    %v356 = vld [vmem:[#allocation2 + $0x8e8] sm:$0xff]
    %v357 = vld [vmem:[#allocation2 + $0x8f0] sm:$0xff]
    %v358 = vld [vmem:[#allocation2 + $0x8f8] sm:$0xff]
    %v359 = vld [vmem:[#allocation2 + $0x900] sm:$0xff]
    %v360 = vld [vmem:[#allocation2 + $0x908] sm:$0xff]
    %v361 = vld [vmem:[#allocation2 + $0x910] sm:$0xff]
    %v362 = vld [vmem:[#allocation2 + $0x918] sm:$0xff]
    %v363 = vld [vmem:[#allocation2 + $0x920] sm:$0xff]
    %v364 = vld [vmem:[#allocation2 + $0x928] sm:$0xff]
    %v365 = vld [vmem:[#allocation2 + $0x930] sm:$0xff]
    %v366 = vld [vmem:[#allocation2 + $0x938] sm:$0xff]
    %v367 = vld [vmem:[#allocation2 + $0x940] sm:$0xff]
    %v368 = vld [vmem:[#allocation2 + $0x948] sm:$0xff]
    %v369 = vld [vmem:[#allocation2 + $0x950] sm:$0xff]
    %v370 = vld [vmem:[#allocation2 + $0x958] sm:$0xff]
    %v371 = vld [vmem:[#allocation2 + $0x960] sm:$0xff]
    %v372 = vld [vmem:[#allocation2 + $0x968] sm:$0xff]
    %v373 = vld [vmem:[#allocation2 + $0x970] sm:$0xff]
    %v374 = vld [vmem:[#allocation2 + $0x978] sm:$0xff]
    %v375 = vld [vmem:[#allocation2 + $0x980] sm:$0xff]
    %v376 = vld [vmem:[#allocation2 + $0x988] sm:$0xff]
    %v377 = vld [vmem:[#allocation2 + $0x990] sm:$0xff]
    %v378 = vld [vmem:[#allocation2 + $0x998] sm:$0xff]
    %v379 = vld [vmem:[#allocation2 + $0x9a0] sm:$0xff]
    %v380 = vld [vmem:[#allocation2 + $0x9a8] sm:$0xff]
    %v381 = vld [vmem:[#allocation2 + $0x9b0] sm:$0xff]
    %v382 = vld [vmem:[#allocation2 + $0x9b8] sm:$0xff]
    %v383 = vld [vmem:[#allocation2 + $0x9c0] sm:$0xff]
    %v384 = vld [vmem:[#allocation2 + $0x9c8] sm:$0xff]
    %v385 = vld [vmem:[#allocation2 + $0x9d0] sm:$0xff]
    %v386 = vld [vmem:[#allocation2 + $0x9d8] sm:$0xff]
    %v387 = vld [vmem:[#allocation2 + $0x9e0] sm:$0xff]
    %v388 = vld [vmem:[#allocation2 + $0x9e8] sm:$0xff]
    %v389 = vld [vmem:[#allocation2 + $0x9f0] sm:$0xff]
    %v390 = vld [vmem:[#allocation2 + $0x9f8] sm:$0xff]
    %v391 = vld [vmem:[#allocation2 + $0xa00] sm:$0xff]
    %v392 = vld [vmem:[#allocation2 + $0xa08] sm:$0xff]
    %v393 = vld [vmem:[#allocation2 + $0xa10] sm:$0xff]
    %v394 = vld [vmem:[#allocation2 + $0xa18] sm:$0xff]
    %v395 = vld [vmem:[#allocation2 + $0xa20] sm:$0xff]
    %v396 = vld [vmem:[#allocation2 + $0xa28] sm:$0xff]
    %v397 = vld [vmem:[#allocation2 + $0xa30] sm:$0xff]
    %v398 = vld [vmem:[#allocation2 + $0xa38] sm:$0xff]
    %v399 = vld [vmem:[#allocation2 + $0xa40] sm:$0xff]
    %v400 = vld [vmem:[#allocation2 + $0xa48] sm:$0xff]
    %v401 = vld [vmem:[#allocation2 + $0xa50] sm:$0xff]
    %v402 = vld [vmem:[#allocation2 + $0xa58] sm:$0xff]
    %v403 = vld [vmem:[#allocation2 + $0xa60] sm:$0xff]
    %v404 = vld [vmem:[#allocation2 + $0xa68] sm:$0xff]
    %v405 = vld [vmem:[#allocation2 + $0xa70] sm:$0xff]
    %v406 = vld [vmem:[#allocation2 + $0xa78] sm:$0xff]
    %v407 = vld [vmem:[#allocation2 + $0xa80] sm:$0xff]
    %v408 = vld [vmem:[#allocation2 + $0xa88] sm:$0xff]
    %v409 = vld [vmem:[#allocation2 + $0xa90] sm:$0xff]
    %v410 = vld [vmem:[#allocation2 + $0xa98] sm:$0xff]
    %v411 = vld [vmem:[#allocation2 + $0xaa0] sm:$0xff]
    %v412 = vld [vmem:[#allocation2 + $0xaa8] sm:$0xff]
    %v413 = vld [vmem:[#allocation2 + $0xab0] sm:$0xff]
    %v414 = vld [vmem:[#allocation2 + $0xab8] sm:$0xff]
    %v415 = vld [vmem:[#allocation2 + $0xac0] sm:$0xff]
    %v416 = vld [vmem:[#allocation2 + $0xac8] sm:$0xff]
    %v417 = vld [vmem:[#allocation2 + $0xad0] sm:$0xff]
    %v418 = vld [vmem:[#allocation2 + $0xad8] sm:$0xff]
    %v419 = vld [vmem:[#allocation2 + $0xae0] sm:$0xff]
    %v420 = vld [vmem:[#allocation2 + $0xae8] sm:$0xff]
    %v421 = vld [vmem:[#allocation2 + $0xaf0] sm:$0xff]
    %v422 = vld [vmem:[#allocation2 + $0xaf8] sm:$0xff]
    %v423 = vld [vmem:[#allocation2 + $0xb00] sm:$0xff]
    %v424 = vld [vmem:[#allocation2 + $0xb08] sm:$0xff]
    %v425 = vld [vmem:[#allocation2 + $0xb10] sm:$0xff]
    %v426 = vld [vmem:[#allocation2 + $0xb18] sm:$0xff]
    %v427 = vld [vmem:[#allocation2 + $0xb20] sm:$0xff]
    %v428 = vld [vmem:[#allocation2 + $0xb28] sm:$0xff]
    %v429 = vld [vmem:[#allocation2 + $0xb30] sm:$0xff]
    %v430 = vld [vmem:[#allocation2 + $0xb38] sm:$0xff]
    %v431 = vld [vmem:[#allocation2 + $0xb40] sm:$0xff]
    %v432 = vld [vmem:[#allocation2 + $0xb48] sm:$0xff]
    %v433 = vld [vmem:[#allocation2 + $0xb50] sm:$0xff]
    %v434 = vld [vmem:[#allocation2 + $0xb58] sm:$0xff]
    %v435 = vld [vmem:[#allocation2 + $0xb60] sm:$0xff]
    %v436 = vld [vmem:[#allocation2 + $0xb68] sm:$0xff]
    %v437 = vld [vmem:[#allocation2 + $0xb70] sm:$0xff]
    %v438 = vld [vmem:[#allocation2 + $0xb78] sm:$0xff]
    %v439 = vld [vmem:[#allocation2 + $0xb80] sm:$0xff]
    %v440 = vld [vmem:[#allocation2 + $0xb88] sm:$0xff]
    %v441 = vld [vmem:[#allocation2 + $0xb90] sm:$0xff]
    %v442 = vld [vmem:[#allocation2 + $0xb98] sm:$0xff]
    %v443 = vld [vmem:[#allocation2 + $0xba0] sm:$0xff]
    %v444 = vld [vmem:[#allocation2 + $0xba8] sm:$0xff]
    %v445 = vld [vmem:[#allocation2 + $0xbb0] sm:$0xff]
    %v446 = vld [vmem:[#allocation2 + $0xbb8] sm:$0xff]
    %v447 = vld [vmem:[#allocation2 + $0xbc0] sm:$0xff]
    %v448 = vld [vmem:[#allocation2 + $0xbc8] sm:$0xff]
    %v449 = vld [vmem:[#allocation2 + $0xbd0] sm:$0xff]
    %v450 = vld [vmem:[#allocation2 + $0xbd8] sm:$0xff]
    %v451 = vld [vmem:[#allocation2 + $0xbe0] sm:$0xff]
    %v452 = vld [vmem:[#allocation2 + $0xbe8] sm:$0xff]
    %v453 = vld [vmem:[#allocation2 + $0xbf0] sm:$0xff]
    %v454 = vld [vmem:[#allocation2 + $0xbf8] sm:$0xff]
    %v455 = vpack.c.bf16 %v79, %v71
    %v456 = vpack.c.bf16 %v80, %v72
    %v457 = vpack.c.bf16 %v81, %v73
    %v458 = vpack.c.bf16 %v82, %v74
    %v459 = vpack.c.bf16 %v83, %v75
    %v460 = vpack.c.bf16 %v84, %v76
    %v461 = vpack.c.bf16 %v85, %v77
    %v462 = vpack.c.bf16 %v86, %v78
    %v463 = vpack.c.bf16 %v95, %v87
    %v464 = vpack.c.bf16 %v96, %v88
    %v465 = vpack.c.bf16 %v97, %v89
    %v466 = vpack.c.bf16 %v98, %v90
    %v467 = vpack.c.bf16 %v99, %v91
    %v468 = vpack.c.bf16 %v100, %v92
    %v469 = vpack.c.bf16 %v101, %v93
    %v470 = vpack.c.bf16 %v102, %v94
    %v471 = vpack.c.bf16 %v111, %v103
    %v472 = vpack.c.bf16 %v112, %v104
    %v473 = vpack.c.bf16 %v113, %v105
    %v474 = vpack.c.bf16 %v114, %v106
    %v475 = vpack.c.bf16 %v115, %v107
    %v476 = vpack.c.bf16 %v116, %v108
    %v477 = vpack.c.bf16 %v117, %v109
    %v478 = vpack.c.bf16 %v118, %v110
    %v479 = vpack.c.bf16 %v127, %v119
    %v480 = vpack.c.bf16 %v128, %v120
    %v481 = vpack.c.bf16 %v129, %v121
    %v482 = vpack.c.bf16 %v130, %v122
    %v483 = vpack.c.bf16 %v131, %v123
    %v484 = vpack.c.bf16 %v132, %v124
    %v485 = vpack.c.bf16 %v133, %v125
    %v486 = vpack.c.bf16 %v134, %v126
    %v487 = vpack.c.bf16 %v143, %v135
    %v488 = vpack.c.bf16 %v144, %v136
    %v489 = vpack.c.bf16 %v145, %v137
    %v490 = vpack.c.bf16 %v146, %v138
    %v491 = vpack.c.bf16 %v147, %v139
    %v492 = vpack.c.bf16 %v148, %v140
    %v493 = vpack.c.bf16 %v149, %v141
    %v494 = vpack.c.bf16 %v150, %v142
    %v495 = vpack.c.bf16 %v159, %v151
    %v496 = vpack.c.bf16 %v160, %v152
    %v497 = vpack.c.bf16 %v161, %v153
    %v498 = vpack.c.bf16 %v162, %v154
    %v499 = vpack.c.bf16 %v163, %v155
    %v500 = vpack.c.bf16 %v164, %v156
    %v501 = vpack.c.bf16 %v165, %v157
    %v502 = vpack.c.bf16 %v166, %v158
    %v503 = vpack.c.bf16 %v175, %v167
    %v504 = vpack.c.bf16 %v176, %v168
    %v505 = vpack.c.bf16 %v177, %v169
    %v506 = vpack.c.bf16 %v178, %v170
    %v507 = vpack.c.bf16 %v179, %v171
    %v508 = vpack.c.bf16 %v180, %v172
    %v509 = vpack.c.bf16 %v181, %v173
    %v510 = vpack.c.bf16 %v182, %v174
    %v511 = vpack.c.bf16 %v191, %v183
    %v512 = vpack.c.bf16 %v192, %v184
    %v513 = vpack.c.bf16 %v193, %v185
    %v514 = vpack.c.bf16 %v194, %v186
    %v515 = vpack.c.bf16 %v195, %v187
    %v516 = vpack.c.bf16 %v196, %v188
    %v517 = vpack.c.bf16 %v197, %v189
    %v518 = vpack.c.bf16 %v198, %v190
    %v519 = vpack.c.bf16 %v207, %v199
    %v520 = vpack.c.bf16 %v208, %v200
    %v521 = vpack.c.bf16 %v209, %v201
    %v522 = vpack.c.bf16 %v210, %v202
    %v523 = vpack.c.bf16 %v211, %v203
    %v524 = vpack.c.bf16 %v212, %v204
    %v525 = vpack.c.bf16 %v213, %v205
    %v526 = vpack.c.bf16 %v214, %v206
    %v527 = vpack.c.bf16 %v223, %v215
    %v528 = vpack.c.bf16 %v224, %v216
    %v529 = vpack.c.bf16 %v225, %v217
    %v530 = vpack.c.bf16 %v226, %v218
    %v531 = vpack.c.bf16 %v227, %v219
    %v532 = vpack.c.bf16 %v228, %v220
    %v533 = vpack.c.bf16 %v229, %v221
    %v534 = vpack.c.bf16 %v230, %v222
    %v535 = vpack.c.bf16 %v239, %v231
    %v536 = vpack.c.bf16 %v240, %v232
    %v537 = vpack.c.bf16 %v241, %v233
    %v538 = vpack.c.bf16 %v242, %v234
    %v539 = vpack.c.bf16 %v243, %v235
    %v540 = vpack.c.bf16 %v244, %v236
    %v541 = vpack.c.bf16 %v245, %v237
    %v542 = vpack.c.bf16 %v246, %v238
    %v543 = vpack.c.bf16 %v255, %v247
    %v544 = vpack.c.bf16 %v256, %v248
    %v545 = vpack.c.bf16 %v257, %v249
    %v546 = vpack.c.bf16 %v258, %v250
    %v547 = vpack.c.bf16 %v259, %v251
    %v548 = vpack.c.bf16 %v260, %v252
    %v549 = vpack.c.bf16 %v261, %v253
    %v550 = vpack.c.bf16 %v262, %v254
    %v551 = vpack.c.bf16 %v271, %v263
    %v552 = vpack.c.bf16 %v272, %v264
    %v553 = vpack.c.bf16 %v273, %v265
    %v554 = vpack.c.bf16 %v274, %v266
    %v555 = vpack.c.bf16 %v275, %v267
    %v556 = vpack.c.bf16 %v276, %v268
    %v557 = vpack.c.bf16 %v277, %v269
    %v558 = vpack.c.bf16 %v278, %v270
    %v559 = vpack.c.bf16 %v287, %v279
    %v560 = vpack.c.bf16 %v288, %v280
    %v561 = vpack.c.bf16 %v289, %v281
    %v562 = vpack.c.bf16 %v290, %v282
    %v563 = vpack.c.bf16 %v291, %v283
    %v564 = vpack.c.bf16 %v292, %v284
    %v565 = vpack.c.bf16 %v293, %v285
    %v566 = vpack.c.bf16 %v294, %v286
    %v567 = vpack.c.bf16 %v303, %v295
    %v568 = vpack.c.bf16 %v304, %v296
    %v569 = vpack.c.bf16 %v305, %v297
    %v570 = vpack.c.bf16 %v306, %v298
    %v571 = vpack.c.bf16 %v307, %v299
    %v572 = vpack.c.bf16 %v308, %v300
    %v573 = vpack.c.bf16 %v309, %v301
    %v574 = vpack.c.bf16 %v310, %v302
    %v575 = vpack.c.bf16 %v319, %v311
    %v576 = vpack.c.bf16 %v320, %v312
    %v577 = vpack.c.bf16 %v321, %v313
    %v578 = vpack.c.bf16 %v322, %v314
    %v579 = vpack.c.bf16 %v323, %v315
    %v580 = vpack.c.bf16 %v324, %v316
    %v581 = vpack.c.bf16 %v325, %v317
    %v582 = vpack.c.bf16 %v326, %v318
    %v583 = vpack.c.bf16 %v335, %v327
    %v584 = vpack.c.bf16 %v336, %v328
    %v585 = vpack.c.bf16 %v337, %v329
    %v586 = vpack.c.bf16 %v338, %v330
    %v587 = vpack.c.bf16 %v339, %v331
    %v588 = vpack.c.bf16 %v340, %v332
    %v589 = vpack.c.bf16 %v341, %v333
    %v590 = vpack.c.bf16 %v342, %v334
    %v591 = vpack.c.bf16 %v351, %v343
    %v592 = vpack.c.bf16 %v352, %v344
    %v593 = vpack.c.bf16 %v353, %v345
    %v594 = vpack.c.bf16 %v354, %v346
    %v595 = vpack.c.bf16 %v355, %v347
    %v596 = vpack.c.bf16 %v356, %v348
    %v597 = vpack.c.bf16 %v357, %v349
    %v598 = vpack.c.bf16 %v358, %v350
    %v599 = vpack.c.bf16 %v367, %v359
    %v600 = vpack.c.bf16 %v368, %v360
    %v601 = vpack.c.bf16 %v369, %v361
    %v602 = vpack.c.bf16 %v370, %v362
    %v603 = vpack.c.bf16 %v371, %v363
    %v604 = vpack.c.bf16 %v372, %v364
    %v605 = vpack.c.bf16 %v373, %v365
    %v606 = vpack.c.bf16 %v374, %v366
    %v607 = vpack.c.bf16 %v383, %v375
    %v608 = vpack.c.bf16 %v384, %v376
    %v609 = vpack.c.bf16 %v385, %v377
    %v610 = vpack.c.bf16 %v386, %v378
    %v611 = vpack.c.bf16 %v387, %v379
    %v612 = vpack.c.bf16 %v388, %v380
    %v613 = vpack.c.bf16 %v389, %v381
    %v614 = vpack.c.bf16 %v390, %v382
    %v615 = vpack.c.bf16 %v399, %v391
    %v616 = vpack.c.bf16 %v400, %v392
    %v617 = vpack.c.bf16 %v401, %v393
    %v618 = vpack.c.bf16 %v402, %v394
    %v619 = vpack.c.bf16 %v403, %v395
    %v620 = vpack.c.bf16 %v404, %v396
    %v621 = vpack.c.bf16 %v405, %v397
    %v622 = vpack.c.bf16 %v406, %v398
    %v623 = vpack.c.bf16 %v415, %v407
    %v624 = vpack.c.bf16 %v416, %v408
    %v625 = vpack.c.bf16 %v417, %v409
    %v626 = vpack.c.bf16 %v418, %v410
    %v627 = vpack.c.bf16 %v419, %v411
    %v628 = vpack.c.bf16 %v420, %v412
    %v629 = vpack.c.bf16 %v421, %v413
    %v630 = vpack.c.bf16 %v422, %v414
    %v631 = vpack.c.bf16 %v431, %v423
    %v632 = vpack.c.bf16 %v432, %v424
    %v633 = vpack.c.bf16 %v433, %v425
    %v634 = vpack.c.bf16 %v434, %v426
    %v635 = vpack.c.bf16 %v435, %v427
    %v636 = vpack.c.bf16 %v436, %v428
    %v637 = vpack.c.bf16 %v437, %v429
    %v638 = vpack.c.bf16 %v438, %v430
    %v639 = vpack.c.bf16 %v447, %v439
    %v640 = vpack.c.bf16 %v448, %v440
    %v641 = vpack.c.bf16 %v449, %v441
    %v642 = vpack.c.bf16 %v450, %v442
    %v643 = vpack.c.bf16 %v451, %v443
    %v644 = vpack.c.bf16 %v452, %v444
    %v645 = vpack.c.bf16 %v453, %v445
    %v646 = vpack.c.bf16 %v454, %v446
    %v647 = vld [vmem:[#allocation5] sm:$0xff]
    %v648 = vld [vmem:[#allocation5 + $0x8] sm:$0xff]
    %v649 = vld [vmem:[#allocation5 + $0x10] sm:$0xff]
    %v650 = vld [vmem:[#allocation5 + $0x18] sm:$0xff]
    %v651 = vld [vmem:[#allocation5 + $0x20] sm:$0xff]
    %v652 = vld [vmem:[#allocation5 + $0x28] sm:$0xff]
    %v653 = vld [vmem:[#allocation5 + $0x30] sm:$0xff]
    %v654 = vld [vmem:[#allocation5 + $0x38] sm:$0xff]
    %v655 = vld [vmem:[#allocation5 + $0x40] sm:$0xff]
    %v656 = vld [vmem:[#allocation5 + $0x48] sm:$0xff]
    %v657 = vld [vmem:[#allocation5 + $0x50] sm:$0xff]
    %v658 = vld [vmem:[#allocation5 + $0x58] sm:$0xff]
    %v659 = vld [vmem:[#allocation5 + $0x60] sm:$0xff]
    %v660 = vld [vmem:[#allocation5 + $0x68] sm:$0xff]
    %v661 = vld [vmem:[#allocation5 + $0x70] sm:$0xff]
    %v662 = vld [vmem:[#allocation5 + $0x78] sm:$0xff]
    %v663 = vld [vmem:[#allocation5 + $0x80] sm:$0xff]
    %v664 = vld [vmem:[#allocation5 + $0x88] sm:$0xff]
    %v665 = vld [vmem:[#allocation5 + $0x90] sm:$0xff]
    %v666 = vld [vmem:[#allocation5 + $0x98] sm:$0xff]
    %v667 = vld [vmem:[#allocation5 + $0xa0] sm:$0xff]
    %v668 = vld [vmem:[#allocation5 + $0xa8] sm:$0xff]
    %v669 = vld [vmem:[#allocation5 + $0xb0] sm:$0xff]
    %v670 = vld [vmem:[#allocation5 + $0xb8] sm:$0xff]
    %v671 = vld [vmem:[#allocation5 + $0xc0] sm:$0xff]
    %v672 = vld [vmem:[#allocation5 + $0xc8] sm:$0xff]
    %v673 = vld [vmem:[#allocation5 + $0xd0] sm:$0xff]
    %v674 = vld [vmem:[#allocation5 + $0xd8] sm:$0xff]
    %v675 = vld [vmem:[#allocation5 + $0xe0] sm:$0xff]
    %v676 = vld [vmem:[#allocation5 + $0xe8] sm:$0xff]
    %v677 = vld [vmem:[#allocation5 + $0xf0] sm:$0xff]
    %v678 = vld [vmem:[#allocation5 + $0xf8] sm:$0xff]
    %v679 = vld [vmem:[#allocation5 + $0x100] sm:$0xff]
    %v680 = vld [vmem:[#allocation5 + $0x108] sm:$0xff]
    %v681 = vld [vmem:[#allocation5 + $0x110] sm:$0xff]
    %v682 = vld [vmem:[#allocation5 + $0x118] sm:$0xff]
    %v683 = vld [vmem:[#allocation5 + $0x120] sm:$0xff]
    %v684 = vld [vmem:[#allocation5 + $0x128] sm:$0xff]
    %v685 = vld [vmem:[#allocation5 + $0x130] sm:$0xff]
    %v686 = vld [vmem:[#allocation5 + $0x138] sm:$0xff]
    %v687 = vld [vmem:[#allocation5 + $0x140] sm:$0xff]
    %v688 = vld [vmem:[#allocation5 + $0x148] sm:$0xff]
    %v689 = vld [vmem:[#allocation5 + $0x150] sm:$0xff]
    %v690 = vld [vmem:[#allocation5 + $0x158] sm:$0xff]
    %v691 = vld [vmem:[#allocation5 + $0x160] sm:$0xff]
    %v692 = vld [vmem:[#allocation5 + $0x168] sm:$0xff]
    %v693 = vld [vmem:[#allocation5 + $0x170] sm:$0xff]
    %v694 = vld [vmem:[#allocation5 + $0x178] sm:$0xff]
    %v695 = vld [vmem:[#allocation5 + $0x180] sm:$0xff]
    %v696 = vld [vmem:[#allocation5 + $0x188] sm:$0xff]
    %v697 = vld [vmem:[#allocation5 + $0x190] sm:$0xff]
    %v698 = vld [vmem:[#allocation5 + $0x198] sm:$0xff]
    %v699 = vld [vmem:[#allocation5 + $0x1a0] sm:$0xff]
    %v700 = vld [vmem:[#allocation5 + $0x1a8] sm:$0xff]
    %v701 = vld [vmem:[#allocation5 + $0x1b0] sm:$0xff]
    %v702 = vld [vmem:[#allocation5 + $0x1b8] sm:$0xff]
    %v703 = vld [vmem:[#allocation5 + $0x1c0] sm:$0xff]
    %v704 = vld [vmem:[#allocation5 + $0x1c8] sm:$0xff]
    %v705 = vld [vmem:[#allocation5 + $0x1d0] sm:$0xff]
    %v706 = vld [vmem:[#allocation5 + $0x1d8] sm:$0xff]
    %v707 = vld [vmem:[#allocation5 + $0x1e0] sm:$0xff]
    %v708 = vld [vmem:[#allocation5 + $0x1e8] sm:$0xff]
    %v709 = vld [vmem:[#allocation5 + $0x1f0] sm:$0xff]
    %v710 = vld [vmem:[#allocation5 + $0x1f8] sm:$0xff]
    %v711 = vld [vmem:[#allocation5 + $0x200] sm:$0xff]
    %v712 = vld [vmem:[#allocation5 + $0x208] sm:$0xff]
    %v713 = vld [vmem:[#allocation5 + $0x210] sm:$0xff]
    %v714 = vld [vmem:[#allocation5 + $0x218] sm:$0xff]
    %v715 = vld [vmem:[#allocation5 + $0x220] sm:$0xff]
    %v716 = vld [vmem:[#allocation5 + $0x228] sm:$0xff]
    %v717 = vld [vmem:[#allocation5 + $0x230] sm:$0xff]
    %v718 = vld [vmem:[#allocation5 + $0x238] sm:$0xff]
    %v719 = vld [vmem:[#allocation5 + $0x240] sm:$0xff]
    %v720 = vld [vmem:[#allocation5 + $0x248] sm:$0xff]
    %v721 = vld [vmem:[#allocation5 + $0x250] sm:$0xff]
    %v722 = vld [vmem:[#allocation5 + $0x258] sm:$0xff]
    %v723 = vld [vmem:[#allocation5 + $0x260] sm:$0xff]
    %v724 = vld [vmem:[#allocation5 + $0x268] sm:$0xff]
    %v725 = vld [vmem:[#allocation5 + $0x270] sm:$0xff]
    %v726 = vld [vmem:[#allocation5 + $0x278] sm:$0xff]
    %v727 = vld [vmem:[#allocation5 + $0x280] sm:$0xff]
    %v728 = vld [vmem:[#allocation5 + $0x288] sm:$0xff]
    %v729 = vld [vmem:[#allocation5 + $0x290] sm:$0xff]
    %v730 = vld [vmem:[#allocation5 + $0x298] sm:$0xff]
    %v731 = vld [vmem:[#allocation5 + $0x2a0] sm:$0xff]
    %v732 = vld [vmem:[#allocation5 + $0x2a8] sm:$0xff]
    %v733 = vld [vmem:[#allocation5 + $0x2b0] sm:$0xff]
    %v734 = vld [vmem:[#allocation5 + $0x2b8] sm:$0xff]
    %v735 = vld [vmem:[#allocation5 + $0x2c0] sm:$0xff]
    %v736 = vld [vmem:[#allocation5 + $0x2c8] sm:$0xff]
    %v737 = vld [vmem:[#allocation5 + $0x2d0] sm:$0xff]
    %v738 = vld [vmem:[#allocation5 + $0x2d8] sm:$0xff]
    %v739 = vld [vmem:[#allocation5 + $0x2e0] sm:$0xff]
    %v740 = vld [vmem:[#allocation5 + $0x2e8] sm:$0xff]
    %v741 = vld [vmem:[#allocation5 + $0x2f0] sm:$0xff]
    %v742 = vld [vmem:[#allocation5 + $0x2f8] sm:$0xff]
    %v743 = vld [vmem:[#allocation5 + $0x300] sm:$0xff]
    %v744 = vld [vmem:[#allocation5 + $0x308] sm:$0xff]
    %v745 = vld [vmem:[#allocation5 + $0x310] sm:$0xff]
    %v746 = vld [vmem:[#allocation5 + $0x318] sm:$0xff]
    %v747 = vld [vmem:[#allocation5 + $0x320] sm:$0xff]
    %v748 = vld [vmem:[#allocation5 + $0x328] sm:$0xff]
    %v749 = vld [vmem:[#allocation5 + $0x330] sm:$0xff]
    %v750 = vld [vmem:[#allocation5 + $0x338] sm:$0xff]
    %v751 = vld [vmem:[#allocation5 + $0x340] sm:$0xff]
    %v752 = vld [vmem:[#allocation5 + $0x348] sm:$0xff]
    %v753 = vld [vmem:[#allocation5 + $0x350] sm:$0xff]
    %v754 = vld [vmem:[#allocation5 + $0x358] sm:$0xff]
    %v755 = vld [vmem:[#allocation5 + $0x360] sm:$0xff]
    %v756 = vld [vmem:[#allocation5 + $0x368] sm:$0xff]
    %v757 = vld [vmem:[#allocation5 + $0x370] sm:$0xff]
    %v758 = vld [vmem:[#allocation5 + $0x378] sm:$0xff]
    %v759 = vld [vmem:[#allocation5 + $0x380] sm:$0xff]
    %v760 = vld [vmem:[#allocation5 + $0x388] sm:$0xff]
    %v761 = vld [vmem:[#allocation5 + $0x390] sm:$0xff]
    %v762 = vld [vmem:[#allocation5 + $0x398] sm:$0xff]
    %v763 = vld [vmem:[#allocation5 + $0x3a0] sm:$0xff]
    %v764 = vld [vmem:[#allocation5 + $0x3a8] sm:$0xff]
    %v765 = vld [vmem:[#allocation5 + $0x3b0] sm:$0xff]
    %v766 = vld [vmem:[#allocation5 + $0x3b8] sm:$0xff]
    %v767 = vld [vmem:[#allocation5 + $0x3c0] sm:$0xff]
    %v768 = vld [vmem:[#allocation5 + $0x3c8] sm:$0xff]
    %v769 = vld [vmem:[#allocation5 + $0x3d0] sm:$0xff]
    %v770 = vld [vmem:[#allocation5 + $0x3d8] sm:$0xff]
    %v771 = vld [vmem:[#allocation5 + $0x3e0] sm:$0xff]
    %v772 = vld [vmem:[#allocation5 + $0x3e8] sm:$0xff]
    %v773 = vld [vmem:[#allocation5 + $0x3f0] sm:$0xff]
    %v774 = vld [vmem:[#allocation5 + $0x3f8] sm:$0xff]
    %v775 = vld [vmem:[#allocation7] sm:$0x3]
    %v777 = vlaneseq
    %v778 = vshrl.u32 %v777, 7
    %v779 = vsub.s32 0, %v778
    %v780 = vrot.slane %v775, %v779
    %v781 = vlaneseq
    %v782 = vshrl.u32 %v781, 7
    %v783 = vsub.s32 1, %v782
    %v784 = vrot.slane %v775, %v783
    %v915 = vunpack.c.l.b16 %v647
    %v916 = vunpack.c.h.b16 %v647
    %v917 = vunpack.c.l.b16 %v648
    %v918 = vunpack.c.h.b16 %v648
    %v919 = vunpack.c.l.b16 %v649
    %v920 = vunpack.c.h.b16 %v649
    %v921 = vunpack.c.l.b16 %v650
    %v922 = vunpack.c.h.b16 %v650
    %v923 = vunpack.c.l.b16 %v651
    %v924 = vunpack.c.h.b16 %v651
    %v925 = vunpack.c.l.b16 %v652
    %v926 = vunpack.c.h.b16 %v652
    %v927 = vunpack.c.l.b16 %v653
    %v928 = vunpack.c.h.b16 %v653
    %v929 = vunpack.c.l.b16 %v654
    %v930 = vunpack.c.h.b16 %v654
    %v931 = vunpack.c.l.b16 %v655
    %v932 = vunpack.c.h.b16 %v655
    %v933 = vunpack.c.l.b16 %v656
    %v934 = vunpack.c.h.b16 %v656
    %v935 = vunpack.c.l.b16 %v657
    %v936 = vunpack.c.h.b16 %v657
    %v937 = vunpack.c.l.b16 %v658
    %v938 = vunpack.c.h.b16 %v658
    %v939 = vunpack.c.l.b16 %v659
    %v940 = vunpack.c.h.b16 %v659
    %v941 = vunpack.c.l.b16 %v660
    %v942 = vunpack.c.h.b16 %v660
    %v943 = vunpack.c.l.b16 %v661
    %v944 = vunpack.c.h.b16 %v661
    %v945 = vunpack.c.l.b16 %v662
    %v946 = vunpack.c.h.b16 %v662
    %v947 = vunpack.c.l.b16 %v663
    %v948 = vunpack.c.h.b16 %v663
    %v949 = vunpack.c.l.b16 %v664
    %v950 = vunpack.c.h.b16 %v664
    %v951 = vunpack.c.l.b16 %v665
    %v952 = vunpack.c.h.b16 %v665
    %v953 = vunpack.c.l.b16 %v666
    %v954 = vunpack.c.h.b16 %v666
    %v955 = vunpack.c.l.b16 %v667
    %v956 = vunpack.c.h.b16 %v667
    %v957 = vunpack.c.l.b16 %v668
    %v958 = vunpack.c.h.b16 %v668
    %v959 = vunpack.c.l.b16 %v669
    %v960 = vunpack.c.h.b16 %v669
    %v961 = vunpack.c.l.b16 %v670
    %v962 = vunpack.c.h.b16 %v670
    %v963 = vunpack.c.l.b16 %v671
    %v964 = vunpack.c.h.b16 %v671
    %v965 = vunpack.c.l.b16 %v672
    %v966 = vunpack.c.h.b16 %v672
    %v967 = vunpack.c.l.b16 %v673
    %v968 = vunpack.c.h.b16 %v673
    %v969 = vunpack.c.l.b16 %v674
    %v970 = vunpack.c.h.b16 %v674
    %v971 = vunpack.c.l.b16 %v675
    %v972 = vunpack.c.h.b16 %v675
    %v973 = vunpack.c.l.b16 %v676
    %v974 = vunpack.c.h.b16 %v676
    %v975 = vunpack.c.l.b16 %v677
    %v976 = vunpack.c.h.b16 %v677
    %v977 = vunpack.c.l.b16 %v678
    %v978 = vunpack.c.h.b16 %v678
    %v979 = vunpack.c.l.b16 %v679
    %v980 = vunpack.c.h.b16 %v679
    %v981 = vunpack.c.l.b16 %v680
    %v982 = vunpack.c.h.b16 %v680
    %v983 = vunpack.c.l.b16 %v681
    %v984 = vunpack.c.h.b16 %v681
    %v985 = vunpack.c.l.b16 %v682
    %v986 = vunpack.c.h.b16 %v682
    %v987 = vunpack.c.l.b16 %v683
    %v988 = vunpack.c.h.b16 %v683
    %v989 = vunpack.c.l.b16 %v684
    %v990 = vunpack.c.h.b16 %v684
    %v991 = vunpack.c.l.b16 %v685
    %v992 = vunpack.c.h.b16 %v685
    %v993 = vunpack.c.l.b16 %v686
    %v994 = vunpack.c.h.b16 %v686
    %v995 = vunpack.c.l.b16 %v687
    %v996 = vunpack.c.h.b16 %v687
    %v997 = vunpack.c.l.b16 %v688
    %v998 = vunpack.c.h.b16 %v688
    %v999 = vunpack.c.l.b16 %v689
    %v1000 = vunpack.c.h.b16 %v689
    %v1001 = vunpack.c.l.b16 %v690
    %v1002 = vunpack.c.h.b16 %v690
    %v1003 = vunpack.c.l.b16 %v691
    %v1004 = vunpack.c.h.b16 %v691
    %v1005 = vunpack.c.l.b16 %v692
    %v1006 = vunpack.c.h.b16 %v692
    %v1007 = vunpack.c.l.b16 %v693
    %v1008 = vunpack.c.h.b16 %v693
    %v1009 = vunpack.c.l.b16 %v694
    %v1010 = vunpack.c.h.b16 %v694
    %v1011 = vunpack.c.l.b16 %v695
    %v1012 = vunpack.c.h.b16 %v695
    %v1013 = vunpack.c.l.b16 %v696
    %v1014 = vunpack.c.h.b16 %v696
    %v1015 = vunpack.c.l.b16 %v697
    %v1016 = vunpack.c.h.b16 %v697
    %v1017 = vunpack.c.l.b16 %v698
    %v1018 = vunpack.c.h.b16 %v698
    %v1019 = vunpack.c.l.b16 %v699
    %v1020 = vunpack.c.h.b16 %v699
    %v1021 = vunpack.c.l.b16 %v700
    %v1022 = vunpack.c.h.b16 %v700
    %v1023 = vunpack.c.l.b16 %v701
    %v1024 = vunpack.c.h.b16 %v701
    %v1025 = vunpack.c.l.b16 %v702
    %v1026 = vunpack.c.h.b16 %v702
    %v1027 = vunpack.c.l.b16 %v703
    %v1028 = vunpack.c.h.b16 %v703
    %v1029 = vunpack.c.l.b16 %v704
    %v1030 = vunpack.c.h.b16 %v704
    %v1031 = vunpack.c.l.b16 %v705
    %v1032 = vunpack.c.h.b16 %v705
    %v1033 = vunpack.c.l.b16 %v706
    %v1034 = vunpack.c.h.b16 %v706
    %v1035 = vunpack.c.l.b16 %v707
    %v1036 = vunpack.c.h.b16 %v707
    %v1037 = vunpack.c.l.b16 %v708
    %v1038 = vunpack.c.h.b16 %v708
    %v1039 = vunpack.c.l.b16 %v709
    %v1040 = vunpack.c.h.b16 %v709
    %v1041 = vunpack.c.l.b16 %v710
    %v1042 = vunpack.c.h.b16 %v710
    %v1043 = vunpack.c.l.b16 %v711
    %v1044 = vunpack.c.h.b16 %v711
    %v1045 = vunpack.c.l.b16 %v712
    %v1046 = vunpack.c.h.b16 %v712
    %v1047 = vunpack.c.l.b16 %v713
    %v1048 = vunpack.c.h.b16 %v713
    %v1049 = vunpack.c.l.b16 %v714
    %v1050 = vunpack.c.h.b16 %v714
    %v1051 = vunpack.c.l.b16 %v715
    %v1052 = vunpack.c.h.b16 %v715
    %v1053 = vunpack.c.l.b16 %v716
    %v1054 = vunpack.c.h.b16 %v716
    %v1055 = vunpack.c.l.b16 %v717
    %v1056 = vunpack.c.h.b16 %v717
    %v1057 = vunpack.c.l.b16 %v718
    %v1058 = vunpack.c.h.b16 %v718
    %v1059 = vunpack.c.l.b16 %v719
    %v1060 = vunpack.c.h.b16 %v719
    %v1061 = vunpack.c.l.b16 %v720
    %v1062 = vunpack.c.h.b16 %v720
    %v1063 = vunpack.c.l.b16 %v721
    %v1064 = vunpack.c.h.b16 %v721
    %v1065 = vunpack.c.l.b16 %v722
    %v1066 = vunpack.c.h.b16 %v722
    %v1067 = vunpack.c.l.b16 %v723
    %v1068 = vunpack.c.h.b16 %v723
    %v1069 = vunpack.c.l.b16 %v724
    %v1070 = vunpack.c.h.b16 %v724
    %v1071 = vunpack.c.l.b16 %v725
    %v1072 = vunpack.c.h.b16 %v725
    %v1073 = vunpack.c.l.b16 %v726
    %v1074 = vunpack.c.h.b16 %v726
    %v1075 = vunpack.c.l.b16 %v727
    %v1076 = vunpack.c.h.b16 %v727
    %v1077 = vunpack.c.l.b16 %v728
    %v1078 = vunpack.c.h.b16 %v728
    %v1079 = vunpack.c.l.b16 %v729
    %v1080 = vunpack.c.h.b16 %v729
    %v1081 = vunpack.c.l.b16 %v730
    %v1082 = vunpack.c.h.b16 %v730
    %v1083 = vunpack.c.l.b16 %v731
    %v1084 = vunpack.c.h.b16 %v731
    %v1085 = vunpack.c.l.b16 %v732
    %v1086 = vunpack.c.h.b16 %v732
    %v1087 = vunpack.c.l.b16 %v733
    %v1088 = vunpack.c.h.b16 %v733
    %v1089 = vunpack.c.l.b16 %v734
    %v1090 = vunpack.c.h.b16 %v734
    %v1091 = vunpack.c.l.b16 %v735
    %v1092 = vunpack.c.h.b16 %v735
    %v1093 = vunpack.c.l.b16 %v736
    %v1094 = vunpack.c.h.b16 %v736
    %v1095 = vunpack.c.l.b16 %v737
    %v1096 = vunpack.c.h.b16 %v737
    %v1097 = vunpack.c.l.b16 %v738
    %v1098 = vunpack.c.h.b16 %v738
    %v1099 = vunpack.c.l.b16 %v739
    %v1100 = vunpack.c.h.b16 %v739
    %v1101 = vunpack.c.l.b16 %v740
    %v1102 = vunpack.c.h.b16 %v740
    %v1103 = vunpack.c.l.b16 %v741
    %v1104 = vunpack.c.h.b16 %v741
    %v1105 = vunpack.c.l.b16 %v742
    %v1106 = vunpack.c.h.b16 %v742
    %v1107 = vunpack.c.l.b16 %v743
    %v1108 = vunpack.c.h.b16 %v743
    %v1109 = vunpack.c.l.b16 %v744
    %v1110 = vunpack.c.h.b16 %v744
    %v1111 = vunpack.c.l.b16 %v745
    %v1112 = vunpack.c.h.b16 %v745
    %v1113 = vunpack.c.l.b16 %v746
    %v1114 = vunpack.c.h.b16 %v746
    %v1115 = vunpack.c.l.b16 %v747
    %v1116 = vunpack.c.h.b16 %v747
    %v1117 = vunpack.c.l.b16 %v748
    %v1118 = vunpack.c.h.b16 %v748
    %v1119 = vunpack.c.l.b16 %v749
    %v1120 = vunpack.c.h.b16 %v749
    %v1121 = vunpack.c.l.b16 %v750
    %v1122 = vunpack.c.h.b16 %v750
    %v1123 = vunpack.c.l.b16 %v751
    %v1124 = vunpack.c.h.b16 %v751
    %v1125 = vunpack.c.l.b16 %v752
    %v1126 = vunpack.c.h.b16 %v752
    %v1127 = vunpack.c.l.b16 %v753
    %v1128 = vunpack.c.h.b16 %v753
    %v1129 = vunpack.c.l.b16 %v754
    %v1130 = vunpack.c.h.b16 %v754
    %v1131 = vunpack.c.l.b16 %v755
    %v1132 = vunpack.c.h.b16 %v755
    %v1133 = vunpack.c.l.b16 %v756
    %v1134 = vunpack.c.h.b16 %v756
    %v1135 = vunpack.c.l.b16 %v757
    %v1136 = vunpack.c.h.b16 %v757
    %v1137 = vunpack.c.l.b16 %v758
    %v1138 = vunpack.c.h.b16 %v758
    %v1139 = vunpack.c.l.b16 %v759
    %v1140 = vunpack.c.h.b16 %v759
    %v1141 = vunpack.c.l.b16 %v760
    %v1142 = vunpack.c.h.b16 %v760
    %v1143 = vunpack.c.l.b16 %v761
    %v1144 = vunpack.c.h.b16 %v761
    %v1145 = vunpack.c.l.b16 %v762
    %v1146 = vunpack.c.h.b16 %v762
    %v1147 = vunpack.c.l.b16 %v763
    %v1148 = vunpack.c.h.b16 %v763
    %v1149 = vunpack.c.l.b16 %v764
    %v1150 = vunpack.c.h.b16 %v764
    %v1151 = vunpack.c.l.b16 %v765
    %v1152 = vunpack.c.h.b16 %v765
    %v1153 = vunpack.c.l.b16 %v766
    %v1154 = vunpack.c.h.b16 %v766
    %v1155 = vunpack.c.l.b16 %v767
    %v1156 = vunpack.c.h.b16 %v767
    %v1157 = vunpack.c.l.b16 %v768
    %v1158 = vunpack.c.h.b16 %v768
    %v1159 = vunpack.c.l.b16 %v769
    %v1160 = vunpack.c.h.b16 %v769
    %v1161 = vunpack.c.l.b16 %v770
    %v1162 = vunpack.c.h.b16 %v770
    %v1163 = vunpack.c.l.b16 %v771
    %v1164 = vunpack.c.h.b16 %v771
    %v1165 = vunpack.c.l.b16 %v772
    %v1166 = vunpack.c.h.b16 %v772
    %v1167 = vunpack.c.l.b16 %v773
    %v1168 = vunpack.c.h.b16 %v773
    %v1169 = vunpack.c.l.b16 %v774
    %v1170 = vunpack.c.h.b16 %v774
    %v1171 = vpack.c.b16 %v917, %v915
    %v1172 = vpack.c.b16 %v918, %v916
    %v1173 = vpack.c.b16 %v921, %v919
    %v1174 = vpack.c.b16 %v922, %v920
    %v1175 = vpack.c.b16 %v925, %v923
    %v1176 = vpack.c.b16 %v926, %v924
    %v1177 = vpack.c.b16 %v929, %v927
    %v1178 = vpack.c.b16 %v930, %v928
    %v1179 = vpack.c.b16 %v933, %v931
    %v1180 = vpack.c.b16 %v934, %v932
    %v1181 = vpack.c.b16 %v937, %v935
    %v1182 = vpack.c.b16 %v938, %v936
    %v1183 = vpack.c.b16 %v941, %v939
    %v1184 = vpack.c.b16 %v942, %v940
    %v1185 = vpack.c.b16 %v945, %v943
    %v1186 = vpack.c.b16 %v946, %v944
    %v1187 = vpack.c.b16 %v949, %v947
    %v1188 = vpack.c.b16 %v950, %v948
    %v1189 = vpack.c.b16 %v953, %v951
    %v1190 = vpack.c.b16 %v954, %v952
    %v1191 = vpack.c.b16 %v957, %v955
    %v1192 = vpack.c.b16 %v958, %v956
    %v1193 = vpack.c.b16 %v961, %v959
    %v1194 = vpack.c.b16 %v962, %v960
    %v1195 = vpack.c.b16 %v965, %v963
    %v1196 = vpack.c.b16 %v966, %v964
    %v1197 = vpack.c.b16 %v969, %v967
    %v1198 = vpack.c.b16 %v970, %v968
    %v1199 = vpack.c.b16 %v973, %v971
    %v1200 = vpack.c.b16 %v974, %v972
    %v1201 = vpack.c.b16 %v977, %v975
    %v1202 = vpack.c.b16 %v978, %v976
    %v1203 = vpack.c.b16 %v981, %v979
    %v1204 = vpack.c.b16 %v982, %v980
    %v1205 = vpack.c.b16 %v985, %v983
    %v1206 = vpack.c.b16 %v986, %v984
    %v1207 = vpack.c.b16 %v989, %v987
    %v1208 = vpack.c.b16 %v990, %v988
    %v1209 = vpack.c.b16 %v993, %v991
    %v1210 = vpack.c.b16 %v994, %v992
    %v1211 = vpack.c.b16 %v997, %v995
    %v1212 = vpack.c.b16 %v998, %v996
    %v1213 = vpack.c.b16 %v1001, %v999
    %v1214 = vpack.c.b16 %v1002, %v1000
    %v1215 = vpack.c.b16 %v1005, %v1003
    %v1216 = vpack.c.b16 %v1006, %v1004
    %v1217 = vpack.c.b16 %v1009, %v1007
    %v1218 = vpack.c.b16 %v1010, %v1008
    %v1219 = vpack.c.b16 %v1013, %v1011
    %v1220 = vpack.c.b16 %v1014, %v1012
    %v1221 = vpack.c.b16 %v1017, %v1015
    %v1222 = vpack.c.b16 %v1018, %v1016
    %v1223 = vpack.c.b16 %v1021, %v1019
    %v1224 = vpack.c.b16 %v1022, %v1020
    %v1225 = vpack.c.b16 %v1025, %v1023
    %v1226 = vpack.c.b16 %v1026, %v1024
    %v1227 = vpack.c.b16 %v1029, %v1027
    %v1228 = vpack.c.b16 %v1030, %v1028
    %v1229 = vpack.c.b16 %v1033, %v1031
    %v1230 = vpack.c.b16 %v1034, %v1032
    %v1231 = vpack.c.b16 %v1037, %v1035
    %v1232 = vpack.c.b16 %v1038, %v1036
    %v1233 = vpack.c.b16 %v1041, %v1039
    %v1234 = vpack.c.b16 %v1042, %v1040
    %v1235 = vpack.c.b16 %v1045, %v1043
    %v1236 = vpack.c.b16 %v1046, %v1044
    %v1237 = vpack.c.b16 %v1049, %v1047
    %v1238 = vpack.c.b16 %v1050, %v1048
    %v1239 = vpack.c.b16 %v1053, %v1051
    %v1240 = vpack.c.b16 %v1054, %v1052
    %v1241 = vpack.c.b16 %v1057, %v1055
    %v1242 = vpack.c.b16 %v1058, %v1056
    %v1243 = vpack.c.b16 %v1061, %v1059
    %v1244 = vpack.c.b16 %v1062, %v1060
    %v1245 = vpack.c.b16 %v1065, %v1063
    %v1246 = vpack.c.b16 %v1066, %v1064
    %v1247 = vpack.c.b16 %v1069, %v1067
    %v1248 = vpack.c.b16 %v1070, %v1068
    %v1249 = vpack.c.b16 %v1073, %v1071
    %v1250 = vpack.c.b16 %v1074, %v1072
    %v1251 = vpack.c.b16 %v1077, %v1075
    %v1252 = vpack.c.b16 %v1078, %v1076
    %v1253 = vpack.c.b16 %v1081, %v1079
    %v1254 = vpack.c.b16 %v1082, %v1080
    %v1255 = vpack.c.b16 %v1085, %v1083
    %v1256 = vpack.c.b16 %v1086, %v1084
    %v1257 = vpack.c.b16 %v1089, %v1087
    %v1258 = vpack.c.b16 %v1090, %v1088
    %v1259 = vpack.c.b16 %v1093, %v1091
    %v1260 = vpack.c.b16 %v1094, %v1092
    %v1261 = vpack.c.b16 %v1097, %v1095
    %v1262 = vpack.c.b16 %v1098, %v1096
    %v1263 = vpack.c.b16 %v1101, %v1099
    %v1264 = vpack.c.b16 %v1102, %v1100
    %v1265 = vpack.c.b16 %v1105, %v1103
    %v1266 = vpack.c.b16 %v1106, %v1104
    %v1267 = vpack.c.b16 %v1109, %v1107
    %v1268 = vpack.c.b16 %v1110, %v1108
    %v1269 = vpack.c.b16 %v1113, %v1111
    %v1270 = vpack.c.b16 %v1114, %v1112
    %v1271 = vpack.c.b16 %v1117, %v1115
    %v1272 = vpack.c.b16 %v1118, %v1116
    %v1273 = vpack.c.b16 %v1121, %v1119
    %v1274 = vpack.c.b16 %v1122, %v1120
    %v1275 = vpack.c.b16 %v1125, %v1123
    %v1276 = vpack.c.b16 %v1126, %v1124
    %v1277 = vpack.c.b16 %v1129, %v1127
    %v1278 = vpack.c.b16 %v1130, %v1128
    %v1279 = vpack.c.b16 %v1133, %v1131
    %v1280 = vpack.c.b16 %v1134, %v1132
    %v1281 = vpack.c.b16 %v1137, %v1135
    %v1282 = vpack.c.b16 %v1138, %v1136
    %v1283 = vpack.c.b16 %v1141, %v1139
    %v1284 = vpack.c.b16 %v1142, %v1140
    %v1285 = vpack.c.b16 %v1145, %v1143
    %v1286 = vpack.c.b16 %v1146, %v1144
    %v1287 = vpack.c.b16 %v1149, %v1147
    %v1288 = vpack.c.b16 %v1150, %v1148
    %v1289 = vpack.c.b16 %v1153, %v1151
    %v1290 = vpack.c.b16 %v1154, %v1152
    %v1291 = vpack.c.b16 %v1157, %v1155
    %v1292 = vpack.c.b16 %v1158, %v1156
    %v1293 = vpack.c.b16 %v1161, %v1159
    %v1294 = vpack.c.b16 %v1162, %v1160
    %v1295 = vpack.c.b16 %v1165, %v1163
    %v1296 = vpack.c.b16 %v1166, %v1164
    %v1297 = vpack.c.b16 %v1169, %v1167
    %v1298 = vpack.c.b16 %v1170, %v1168
    %1427 = vmatprep.subr.bf16.mxu0 %v1172
    %1428 = vmatpush1.bf16.msra.mxu0 %v1171
    %1429 = vmatprep.subr.bf16.mxu0 %v1174
    %1430 = vmatpush1.bf16.msra.mxu0 %v1173
    %1431 = vmatprep.subr.bf16.mxu0 %v1176
    %1432 = vmatpush1.bf16.msra.mxu0 %v1175
    %1433 = vmatprep.subr.bf16.mxu0 %v1178
    %1434 = vmatpush1.bf16.msra.mxu0 %v1177
    %1435 = vmatprep.subr.bf16.mxu0 %v1180
    %1436 = vmatpush1.bf16.msra.mxu0 %v1179
    %1437 = vmatprep.subr.bf16.mxu0 %v1182
    %1438 = vmatpush1.bf16.msra.mxu0 %v1181
    %1439 = vmatprep.subr.bf16.mxu0 %v1184
    %1440 = vmatpush1.bf16.msra.mxu0 %v1183
    %1441 = vmatprep.subr.bf16.mxu0 %v1186
    %1442 = vmatpush1.bf16.msra.mxu0 %v1185
    %1443 = vmatprep.subr.bf16.mxu0 %v1188
    %1444 = vmatpush1.bf16.msra.mxu0 %v1187
    %1445 = vmatprep.subr.bf16.mxu0 %v1190
    %1446 = vmatpush1.bf16.msra.mxu0 %v1189
    %1447 = vmatprep.subr.bf16.mxu0 %v1192
    %1448 = vmatpush1.bf16.msra.mxu0 %v1191
    %1449 = vmatprep.subr.bf16.mxu0 %v1194
    %1450 = vmatpush1.bf16.msra.mxu0 %v1193
    %1451 = vmatprep.subr.bf16.mxu0 %v1196
    %1452 = vmatpush1.bf16.msra.mxu0 %v1195
    %1453 = vmatprep.subr.bf16.mxu0 %v1198
    %1454 = vmatpush1.bf16.msra.mxu0 %v1197
    %1455 = vmatprep.subr.bf16.mxu0 %v1200
    %1456 = vmatpush1.bf16.msra.mxu0 %v1199
    %1457 = vmatprep.subr.bf16.mxu0 %v1202
    %1458 = vmatpush1.bf16.msra.mxu0 %v1201
    %1459 = vmatprep.mubr.bf16.mxu0 %v456
    %1460 = vmatmul.mubr.bf16.gmra.mrb[0].mxu0 %v455
    %v1461 = vpop.f32.mrb[0].mxu0
    %v1462 = vadd.f32 %v780, %v1461
    %v1463 = vpop.f32.mrb[0].mxu0
    %v1464 = vadd.f32 %v784, %v1463
    %v1465 = vpop.f32.mrb[0].mxu0
    %v1466 = vadd.f32 %v780, %v1465
    %v1467 = vpop.f32.mrb[0].mxu0
    %v1468 = vadd.f32 %v784, %v1467
    %1469 = vmatprep.mubr.bf16.mxu0 %v464
    %1470 = vmatmul.mubr.bf16.gmra.mrb[0].mxu0 %v463
    %v1471 = vpop.f32.mrb[0].mxu0
    %v1472 = vadd.f32 %v780, %v1471
    %v1473 = vpop.f32.mrb[0].mxu0
    %v1474 = vadd.f32 %v784, %v1473
    %v1475 = vpop.f32.mrb[0].mxu0
    %v1476 = vadd.f32 %v780, %v1475
    %v1477 = vpop.f32.mrb[0].mxu0
    %v1478 = vadd.f32 %v784, %v1477
    %1479 = vmatprep.mubr.bf16.mxu0 %v472
    %1480 = vmatmul.mubr.bf16.gmra.mrb[0].mxu0 %v471
    %v1481 = vpop.f32.mrb[0].mxu0
    %v1482 = vadd.f32 %v780, %v1481
    %v1483 = vpop.f32.mrb[0].mxu0
    %v1484 = vadd.f32 %v784, %v1483
    %v1485 = vpop.f32.mrb[0].mxu0
    %v1486 = vadd.f32 %v780, %v1485
    %v1487 = vpop.f32.mrb[0].mxu0
    %v1488 = vadd.f32 %v784, %v1487
    %1489 = vmatprep.mubr.bf16.mxu0 %v480
    %1490 = vmatmul.mubr.bf16.gmra.mrb[0].mxu0 %v479
    %v1491 = vpop.f32.mrb[0].mxu0
    %v1492 = vadd.f32 %v780, %v1491
    %v1493 = vpop.f32.mrb[0].mxu0
    %v1494 = vadd.f32 %v784, %v1493
    %v1495 = vpop.f32.mrb[0].mxu0
    %v1496 = vadd.f32 %v780, %v1495
    %v1497 = vpop.f32.mrb[0].mxu0
    %v1498 = vadd.f32 %v784, %v1497
    %1499 = vmatprep.mubr.bf16.mxu0 %v488
    %1500 = vmatmul.mubr.bf16.gmra.mrb[0].mxu0 %v487
    %v1501 = vpop.f32.mrb[0].mxu0
    %v1502 = vadd.f32 %v780, %v1501
    %v1503 = vpop.f32.mrb[0].mxu0
    %v1504 = vadd.f32 %v784, %v1503
    %v1505 = vpop.f32.mrb[0].mxu0
    %v1506 = vadd.f32 %v780, %v1505
    %v1507 = vpop.f32.mrb[0].mxu0
    %v1508 = vadd.f32 %v784, %v1507
    %1509 = vmatprep.mubr.bf16.mxu0 %v496
    %1510 = vmatmul.mubr.bf16.gmra.mrb[0].mxu0 %v495
    %v1511 = vpop.f32.mrb[0].mxu0
    %v1512 = vadd.f32 %v780, %v1511
    %v1513 = vpop.f32.mrb[0].mxu0
    %v1514 = vadd.f32 %v784, %v1513
    %v1515 = vpop.f32.mrb[0].mxu0
    %v1516 = vadd.f32 %v780, %v1515
    %v1517 = vpop.f32.mrb[0].mxu0
    %v1518 = vadd.f32 %v784, %v1517
    %1519 = vmatprep.mubr.bf16.mxu0 %v504
    %1520 = vmatmul.mubr.bf16.gmra.mrb[0].mxu0 %v503
    %v1521 = vpop.f32.mrb[0].mxu0
    %v1522 = vadd.f32 %v780, %v1521
    %v1523 = vpop.f32.mrb[0].mxu0
    %v1524 = vadd.f32 %v784, %v1523
    %v1525 = vpop.f32.mrb[0].mxu0
    %v1526 = vadd.f32 %v780, %v1525
    %v1527 = vpop.f32.mrb[0].mxu0
    %v1528 = vadd.f32 %v784, %v1527
    %1529 = vmatprep.mubr.bf16.mxu0 %v512
    %1530 = vmatmul.mubr.bf16.gmra.mrb[0].mxu0 %v511
    %v1531 = vpop.f32.mrb[0].mxu0
    %v1532 = vadd.f32 %v780, %v1531
    %v1533 = vpop.f32.mrb[0].mxu0
    %v1534 = vadd.f32 %v784, %v1533
    %v1535 = vpop.f32.mrb[0].mxu0
    %v1536 = vadd.f32 %v780, %v1535
    %v1537 = vpop.f32.mrb[0].mxu0
    %v1538 = vadd.f32 %v784, %v1537
    %1539 = vmatprep.mubr.bf16.mxu0 %v520
    %1540 = vmatmul.mubr.bf16.gmra.mrb[0].mxu0 %v519
    %v1541 = vpop.f32.mrb[0].mxu0
    %v1542 = vadd.f32 %v780, %v1541
    %v1543 = vpop.f32.mrb[0].mxu0
    %v1544 = vadd.f32 %v784, %v1543
    %v1545 = vpop.f32.mrb[0].mxu0
    %v1546 = vadd.f32 %v780, %v1545
    %v1547 = vpop.f32.mrb[0].mxu0
    %v1548 = vadd.f32 %v784, %v1547
    %1549 = vmatprep.mubr.bf16.mxu0 %v528
    %1550 = vmatmul.mubr.bf16.gmra.mrb[0].mxu0 %v527
    %v1551 = vpop.f32.mrb[0].mxu0
    %v1552 = vadd.f32 %v780, %v1551
    %v1553 = vpop.f32.mrb[0].mxu0
    %v1554 = vadd.f32 %v784, %v1553
    %v1555 = vpop.f32.mrb[0].mxu0
    %v1556 = vadd.f32 %v780, %v1555
    %v1557 = vpop.f32.mrb[0].mxu0
    %v1558 = vadd.f32 %v784, %v1557
    %1559 = vmatprep.mubr.bf16.mxu0 %v536
    %1560 = vmatmul.mubr.bf16.gmra.mrb[0].mxu0 %v535
    %v1561 = vpop.f32.mrb[0].mxu0
    %v1562 = vadd.f32 %v780, %v1561
    %v1563 = vpop.f32.mrb[0].mxu0
    %v1564 = vadd.f32 %v784, %v1563
    %v1565 = vpop.f32.mrb[0].mxu0
    %v1566 = vadd.f32 %v780, %v1565
    %v1567 = vpop.f32.mrb[0].mxu0
    %v1568 = vadd.f32 %v784, %v1567
    %1569 = vmatprep.mubr.bf16.mxu0 %v544
    %1570 = vmatmul.mubr.bf16.gmra.mrb[0].mxu0 %v543
    %v1571 = vpop.f32.mrb[0].mxu0
    %v1572 = vadd.f32 %v780, %v1571
    %v1573 = vpop.f32.mrb[0].mxu0
    %v1574 = vadd.f32 %v784, %v1573
    %v1575 = vpop.f32.mrb[0].mxu0
    %v1576 = vadd.f32 %v780, %v1575
    %v1577 = vpop.f32.mrb[0].mxu0
    %v1578 = vadd.f32 %v784, %v1577
    %1579 = vmatprep.mubr.bf16.mxu0 %v552
    %1580 = vmatmul.mubr.bf16.gmra.mrb[0].mxu0 %v551
    %v1581 = vpop.f32.mrb[0].mxu0
    %v1582 = vadd.f32 %v780, %v1581
    %v1583 = vpop.f32.mrb[0].mxu0
    %v1584 = vadd.f32 %v784, %v1583
    %v1585 = vpop.f32.mrb[0].mxu0
    %v1586 = vadd.f32 %v780, %v1585
    %v1587 = vpop.f32.mrb[0].mxu0
    %v1588 = vadd.f32 %v784, %v1587
    %1589 = vmatprep.mubr.bf16.mxu0 %v560
    %1590 = vmatmul.mubr.bf16.gmra.mrb[0].mxu0 %v559
    %v1591 = vpop.f32.mrb[0].mxu0
    %v1592 = vadd.f32 %v780, %v1591
    %v1593 = vpop.f32.mrb[0].mxu0
    %v1594 = vadd.f32 %v784, %v1593
    %v1595 = vpop.f32.mrb[0].mxu0
    %v1596 = vadd.f32 %v780, %v1595
    %v1597 = vpop.f32.mrb[0].mxu0
    %v1598 = vadd.f32 %v784, %v1597
    %1599 = vmatprep.mubr.bf16.mxu0 %v568
    %1600 = vmatmul.mubr.bf16.gmra.mrb[0].mxu0 %v567
    %v1601 = vpop.f32.mrb[0].mxu0
    %v1602 = vadd.f32 %v780, %v1601
    %v1603 = vpop.f32.mrb[0].mxu0
    %v1604 = vadd.f32 %v784, %v1603
    %v1605 = vpop.f32.mrb[0].mxu0
    %v1606 = vadd.f32 %v780, %v1605
    %v1607 = vpop.f32.mrb[0].mxu0
    %v1608 = vadd.f32 %v784, %v1607
    %1609 = vmatprep.mubr.bf16.mxu0 %v576
    %1610 = vmatmul.mubr.bf16.gmra.mrb[0].mxu0 %v575
    %v1611 = vpop.f32.mrb[0].mxu0
    %v1612 = vadd.f32 %v780, %v1611
    %v1613 = vpop.f32.mrb[0].mxu0
    %v1614 = vadd.f32 %v784, %v1613
    %v1615 = vpop.f32.mrb[0].mxu0
    %v1616 = vadd.f32 %v780, %v1615
    %v1617 = vpop.f32.mrb[0].mxu0
    %v1618 = vadd.f32 %v784, %v1617
    %1619 = vmatprep.mubr.bf16.mxu0 %v584
    %1620 = vmatmul.mubr.bf16.gmra.mrb[0].mxu0 %v583
    %v1621 = vpop.f32.mrb[0].mxu0
    %v1622 = vadd.f32 %v780, %v1621
    %v1623 = vpop.f32.mrb[0].mxu0
    %v1624 = vadd.f32 %v784, %v1623
    %v1625 = vpop.f32.mrb[0].mxu0
    %v1626 = vadd.f32 %v780, %v1625
    %v1627 = vpop.f32.mrb[0].mxu0
    %v1628 = vadd.f32 %v784, %v1627
    %1629 = vmatprep.mubr.bf16.mxu0 %v592
    %1630 = vmatmul.mubr.bf16.gmra.mrb[0].mxu0 %v591
    %v1631 = vpop.f32.mrb[0].mxu0
    %v1632 = vadd.f32 %v780, %v1631
    %v1633 = vpop.f32.mrb[0].mxu0
    %v1634 = vadd.f32 %v784, %v1633
    %v1635 = vpop.f32.mrb[0].mxu0
    %v1636 = vadd.f32 %v780, %v1635
    %v1637 = vpop.f32.mrb[0].mxu0
    %v1638 = vadd.f32 %v784, %v1637
    %1639 = vmatprep.mubr.bf16.mxu0 %v600
    %1640 = vmatmul.mubr.bf16.gmra.mrb[0].mxu0 %v599
    %v1641 = vpop.f32.mrb[0].mxu0
    %v1642 = vadd.f32 %v780, %v1641
    %v1643 = vpop.f32.mrb[0].mxu0
    %v1644 = vadd.f32 %v784, %v1643
    %v1645 = vpop.f32.mrb[0].mxu0
    %v1646 = vadd.f32 %v780, %v1645
    %v1647 = vpop.f32.mrb[0].mxu0
    %v1648 = vadd.f32 %v784, %v1647
    %1649 = vmatprep.mubr.bf16.mxu0 %v608
    %1650 = vmatmul.mubr.bf16.gmra.mrb[0].mxu0 %v607
    %v1651 = vpop.f32.mrb[0].mxu0
    %v1652 = vadd.f32 %v780, %v1651
    %v1653 = vpop.f32.mrb[0].mxu0
    %v1654 = vadd.f32 %v784, %v1653
    %v1655 = vpop.f32.mrb[0].mxu0
    %v1656 = vadd.f32 %v780, %v1655
    %v1657 = vpop.f32.mrb[0].mxu0
    %v1658 = vadd.f32 %v784, %v1657
    %1659 = vmatprep.mubr.bf16.mxu0 %v616
    %1660 = vmatmul.mubr.bf16.gmra.mrb[0].mxu0 %v615
    %v1661 = vpop.f32.mrb[0].mxu0
    %v1662 = vadd.f32 %v780, %v1661
    %v1663 = vpop.f32.mrb[0].mxu0
    %v1664 = vadd.f32 %v784, %v1663
    %v1665 = vpop.f32.mrb[0].mxu0
    %v1666 = vadd.f32 %v780, %v1665
    %v1667 = vpop.f32.mrb[0].mxu0
    %v1668 = vadd.f32 %v784, %v1667
    %1669 = vmatprep.mubr.bf16.mxu0 %v624
    %1670 = vmatmul.mubr.bf16.gmra.mrb[0].mxu0 %v623
    %v1671 = vpop.f32.mrb[0].mxu0
    %v1672 = vadd.f32 %v780, %v1671
    %v1673 = vpop.f32.mrb[0].mxu0
    %v1674 = vadd.f32 %v784, %v1673
    %v1675 = vpop.f32.mrb[0].mxu0
    %v1676 = vadd.f32 %v780, %v1675
    %v1677 = vpop.f32.mrb[0].mxu0
    %v1678 = vadd.f32 %v784, %v1677
    %1679 = vmatprep.mubr.bf16.mxu0 %v632
    %1680 = vmatmul.mubr.bf16.gmra.mrb[0].mxu0 %v631
    %v1681 = vpop.f32.mrb[0].mxu0
    %v1682 = vadd.f32 %v780, %v1681
    %v1683 = vpop.f32.mrb[0].mxu0
    %v1684 = vadd.f32 %v784, %v1683
    %v1685 = vpop.f32.mrb[0].mxu0
    %v1686 = vadd.f32 %v780, %v1685
    %v1687 = vpop.f32.mrb[0].mxu0
    %v1688 = vadd.f32 %v784, %v1687
    %1689 = vmatprep.mubr.bf16.mxu0 %v640
    %1690 = vmatmul.mubr.bf16.gmra.mrb[0].mxu0 %v639
    %v1691 = vpop.f32.mrb[0].mxu0
    %v1692 = vadd.f32 %v780, %v1691
    %v1693 = vpop.f32.mrb[0].mxu0
    %v1694 = vadd.f32 %v784, %v1693
    %v1695 = vpop.f32.mrb[0].mxu0
    %v1696 = vadd.f32 %v780, %v1695
    %v1697 = vpop.f32.mrb[0].mxu0
    %v1698 = vadd.f32 %v784, %v1697
    %1699 = vdwg.mxu0
    %1700 = vmatprep.subr.bf16.mxu0 %v1204
    %1701 = vmatpush1.bf16.msra.mxu0 %v1203
    %1702 = vmatprep.subr.bf16.mxu0 %v1206
    %1703 = vmatpush1.bf16.msra.mxu0 %v1205
    %1704 = vmatprep.subr.bf16.mxu0 %v1208
    %1705 = vmatpush1.bf16.msra.mxu0 %v1207
    %1706 = vmatprep.subr.bf16.mxu0 %v1210
    %1707 = vmatpush1.bf16.msra.mxu0 %v1209
    %1708 = vmatprep.subr.bf16.mxu0 %v1212
    %1709 = vmatpush1.bf16.msra.mxu0 %v1211
    %1710 = vmatprep.subr.bf16.mxu0 %v1214
    %1711 = vmatpush1.bf16.msra.mxu0 %v1213
    %1712 = vmatprep.subr.bf16.mxu0 %v1216
    %1713 = vmatpush1.bf16.msra.mxu0 %v1215
    %1714 = vmatprep.subr.bf16.mxu0 %v1218
    %1715 = vmatpush1.bf16.msra.mxu0 %v1217
    %1716 = vmatprep.subr.bf16.mxu0 %v1220
    %1717 = vmatpush1.bf16.msra.mxu0 %v1219
    %1718 = vmatprep.subr.bf16.mxu0 %v1222
    %1719 = vmatpush1.bf16.msra.mxu0 %v1221
    %1720 = vmatprep.subr.bf16.mxu0 %v1224
    %1721 = vmatpush1.bf16.msra.mxu0 %v1223
    %1722 = vmatprep.subr.bf16.mxu0 %v1226
    %1723 = vmatpush1.bf16.msra.mxu0 %v1225
    %1724 = vmatprep.subr.bf16.mxu0 %v1228
    %1725 = vmatpush1.bf16.msra.mxu0 %v1227
    %1726 = vmatprep.subr.bf16.mxu0 %v1230
    %1727 = vmatpush1.bf16.msra.mxu0 %v1229
    %1728 = vmatprep.subr.bf16.mxu0 %v1232
    %1729 = vmatpush1.bf16.msra.mxu0 %v1231
    %1730 = vmatprep.subr.bf16.mxu0 %v1234
    %1731 = vmatpush1.bf16.msra.mxu0 %v1233
    %1732 = vmatprep.mubr.bf16.mxu0 %v458
    %1733 = vmatmul.mubr.bf16.gmra.mrb[0].mxu0 %v457
    %v1734 = vpop.f32.mrb[0].mxu0
    %v1735 = vadd.f32 %v1462, %v1734
    %v1736 = vpop.f32.mrb[0].mxu0
    %v1737 = vadd.f32 %v1464, %v1736
    %v1738 = vpop.f32.mrb[0].mxu0
    %v1739 = vadd.f32 %v1466, %v1738
    %v1740 = vpop.f32.mrb[0].mxu0
    %v1741 = vadd.f32 %v1468, %v1740
    %1742 = vmatprep.mubr.bf16.mxu0 %v466
    %1743 = vmatmul.mubr.bf16.gmra.mrb[0].mxu0 %v465
    %v1744 = vpop.f32.mrb[0].mxu0
    %v1745 = vadd.f32 %v1472, %v1744
    %v1746 = vpop.f32.mrb[0].mxu0
    %v1747 = vadd.f32 %v1474, %v1746
    %v1748 = vpop.f32.mrb[0].mxu0
    %v1749 = vadd.f32 %v1476, %v1748
    %v1750 = vpop.f32.mrb[0].mxu0
    %v1751 = vadd.f32 %v1478, %v1750
    %1752 = vmatprep.mubr.bf16.mxu0 %v474
    %1753 = vmatmul.mubr.bf16.gmra.mrb[0].mxu0 %v473
    %v1754 = vpop.f32.mrb[0].mxu0
    %v1755 = vadd.f32 %v1482, %v1754
    %v1756 = vpop.f32.mrb[0].mxu0
    %v1757 = vadd.f32 %v1484, %v1756
    %v1758 = vpop.f32.mrb[0].mxu0
    %v1759 = vadd.f32 %v1486, %v1758
    %v1760 = vpop.f32.mrb[0].mxu0
    %v1761 = vadd.f32 %v1488, %v1760
    %1762 = vmatprep.mubr.bf16.mxu0 %v482
    %1763 = vmatmul.mubr.bf16.gmra.mrb[0].mxu0 %v481
    %v1764 = vpop.f32.mrb[0].mxu0
    %v1765 = vadd.f32 %v1492, %v1764
    %v1766 = vpop.f32.mrb[0].mxu0
    %v1767 = vadd.f32 %v1494, %v1766
    %v1768 = vpop.f32.mrb[0].mxu0
    %v1769 = vadd.f32 %v1496, %v1768
    %v1770 = vpop.f32.mrb[0].mxu0
    %v1771 = vadd.f32 %v1498, %v1770
    %1772 = vmatprep.mubr.bf16.mxu0 %v490
    %1773 = vmatmul.mubr.bf16.gmra.mrb[0].mxu0 %v489
    %v1774 = vpop.f32.mrb[0].mxu0
    %v1775 = vadd.f32 %v1502, %v1774
    %v1776 = vpop.f32.mrb[0].mxu0
    %v1777 = vadd.f32 %v1504, %v1776
    %v1778 = vpop.f32.mrb[0].mxu0
    %v1779 = vadd.f32 %v1506, %v1778
    %v1780 = vpop.f32.mrb[0].mxu0
    %v1781 = vadd.f32 %v1508, %v1780
    %1782 = vmatprep.mubr.bf16.mxu0 %v498
    %1783 = vmatmul.mubr.bf16.gmra.mrb[0].mxu0 %v497
    %v1784 = vpop.f32.mrb[0].mxu0
    %v1785 = vadd.f32 %v1512, %v1784
    %v1786 = vpop.f32.mrb[0].mxu0
    %v1787 = vadd.f32 %v1514, %v1786
    %v1788 = vpop.f32.mrb[0].mxu0
    %v1789 = vadd.f32 %v1516, %v1788
    %v1790 = vpop.f32.mrb[0].mxu0
    %v1791 = vadd.f32 %v1518, %v1790
    %1792 = vmatprep.mubr.bf16.mxu0 %v506
    %1793 = vmatmul.mubr.bf16.gmra.mrb[0].mxu0 %v505
    %v1794 = vpop.f32.mrb[0].mxu0
    %v1795 = vadd.f32 %v1522, %v1794
    %v1796 = vpop.f32.mrb[0].mxu0
    %v1797 = vadd.f32 %v1524, %v1796
    %v1798 = vpop.f32.mrb[0].mxu0
    %v1799 = vadd.f32 %v1526, %v1798
    %v1800 = vpop.f32.mrb[0].mxu0
    %v1801 = vadd.f32 %v1528, %v1800
    %1802 = vmatprep.mubr.bf16.mxu0 %v514
    %1803 = vmatmul.mubr.bf16.gmra.mrb[0].mxu0 %v513
    %v1804 = vpop.f32.mrb[0].mxu0
    %v1805 = vadd.f32 %v1532, %v1804
    %v1806 = vpop.f32.mrb[0].mxu0
    %v1807 = vadd.f32 %v1534, %v1806
    %v1808 = vpop.f32.mrb[0].mxu0
    %v1809 = vadd.f32 %v1536, %v1808
    %v1810 = vpop.f32.mrb[0].mxu0
    %v1811 = vadd.f32 %v1538, %v1810
    %1812 = vmatprep.mubr.bf16.mxu0 %v522
    %1813 = vmatmul.mubr.bf16.gmra.mrb[0].mxu0 %v521
    %v1814 = vpop.f32.mrb[0].mxu0
    %v1815 = vadd.f32 %v1542, %v1814
    %v1816 = vpop.f32.mrb[0].mxu0
    %v1817 = vadd.f32 %v1544, %v1816
    %v1818 = vpop.f32.mrb[0].mxu0
    %v1819 = vadd.f32 %v1546, %v1818
    %v1820 = vpop.f32.mrb[0].mxu0
    %v1821 = vadd.f32 %v1548, %v1820
    %1822 = vmatprep.mubr.bf16.mxu0 %v530
    %1823 = vmatmul.mubr.bf16.gmra.mrb[0].mxu0 %v529
    %v1824 = vpop.f32.mrb[0].mxu0
    %v1825 = vadd.f32 %v1552, %v1824
    %v1826 = vpop.f32.mrb[0].mxu0
    %v1827 = vadd.f32 %v1554, %v1826
    %v1828 = vpop.f32.mrb[0].mxu0
    %v1829 = vadd.f32 %v1556, %v1828
    %v1830 = vpop.f32.mrb[0].mxu0
    %v1831 = vadd.f32 %v1558, %v1830
    %1832 = vmatprep.mubr.bf16.mxu0 %v538
    %1833 = vmatmul.mubr.bf16.gmra.mrb[0].mxu0 %v537
    %v1834 = vpop.f32.mrb[0].mxu0
    %v1835 = vadd.f32 %v1562, %v1834
    %v1836 = vpop.f32.mrb[0].mxu0
    %v1837 = vadd.f32 %v1564, %v1836
    %v1838 = vpop.f32.mrb[0].mxu0
    %v1839 = vadd.f32 %v1566, %v1838
    %v1840 = vpop.f32.mrb[0].mxu0
    %v1841 = vadd.f32 %v1568, %v1840
    %1842 = vmatprep.mubr.bf16.mxu0 %v546
    %1843 = vmatmul.mubr.bf16.gmra.mrb[0].mxu0 %v545
    %v1844 = vpop.f32.mrb[0].mxu0
    %v1845 = vadd.f32 %v1572, %v1844
    %v1846 = vpop.f32.mrb[0].mxu0
    %v1847 = vadd.f32 %v1574, %v1846
    %v1848 = vpop.f32.mrb[0].mxu0
    %v1849 = vadd.f32 %v1576, %v1848
    %v1850 = vpop.f32.mrb[0].mxu0
    %v1851 = vadd.f32 %v1578, %v1850
    %1852 = vmatprep.mubr.bf16.mxu0 %v554
    %1853 = vmatmul.mubr.bf16.gmra.mrb[0].mxu0 %v553
    %v1854 = vpop.f32.mrb[0].mxu0
    %v1855 = vadd.f32 %v1582, %v1854
    %v1856 = vpop.f32.mrb[0].mxu0
    %v1857 = vadd.f32 %v1584, %v1856
    %v1858 = vpop.f32.mrb[0].mxu0
    %v1859 = vadd.f32 %v1586, %v1858
    %v1860 = vpop.f32.mrb[0].mxu0
    %v1861 = vadd.f32 %v1588, %v1860
    %1862 = vmatprep.mubr.bf16.mxu0 %v562
    %1863 = vmatmul.mubr.bf16.gmra.mrb[0].mxu0 %v561
    %v1864 = vpop.f32.mrb[0].mxu0
    %v1865 = vadd.f32 %v1592, %v1864
    %v1866 = vpop.f32.mrb[0].mxu0
    %v1867 = vadd.f32 %v1594, %v1866
    %v1868 = vpop.f32.mrb[0].mxu0
    %v1869 = vadd.f32 %v1596, %v1868
    %v1870 = vpop.f32.mrb[0].mxu0
    %v1871 = vadd.f32 %v1598, %v1870
    %1872 = vmatprep.mubr.bf16.mxu0 %v570
    %1873 = vmatmul.mubr.bf16.gmra.mrb[0].mxu0 %v569
    %v1874 = vpop.f32.mrb[0].mxu0
    %v1875 = vadd.f32 %v1602, %v1874
    %v1876 = vpop.f32.mrb[0].mxu0
    %v1877 = vadd.f32 %v1604, %v1876
    %v1878 = vpop.f32.mrb[0].mxu0
    %v1879 = vadd.f32 %v1606, %v1878
    %v1880 = vpop.f32.mrb[0].mxu0
    %v1881 = vadd.f32 %v1608, %v1880
    %1882 = vmatprep.mubr.bf16.mxu0 %v578
    %1883 = vmatmul.mubr.bf16.gmra.mrb[0].mxu0 %v577
    %v1884 = vpop.f32.mrb[0].mxu0
    %v1885 = vadd.f32 %v1612, %v1884
    %v1886 = vpop.f32.mrb[0].mxu0
    %v1887 = vadd.f32 %v1614, %v1886
    %v1888 = vpop.f32.mrb[0].mxu0
    %v1889 = vadd.f32 %v1616, %v1888
    %v1890 = vpop.f32.mrb[0].mxu0
    %v1891 = vadd.f32 %v1618, %v1890
    %1892 = vmatprep.mubr.bf16.mxu0 %v586
    %1893 = vmatmul.mubr.bf16.gmra.mrb[0].mxu0 %v585
    %v1894 = vpop.f32.mrb[0].mxu0
    %v1895 = vadd.f32 %v1622, %v1894
    %v1896 = vpop.f32.mrb[0].mxu0
    %v1897 = vadd.f32 %v1624, %v1896
    %v1898 = vpop.f32.mrb[0].mxu0
    %v1899 = vadd.f32 %v1626, %v1898
    %v1900 = vpop.f32.mrb[0].mxu0
    %v1901 = vadd.f32 %v1628, %v1900
    %1902 = vmatprep.mubr.bf16.mxu0 %v594
    %1903 = vmatmul.mubr.bf16.gmra.mrb[0].mxu0 %v593
    %v1904 = vpop.f32.mrb[0].mxu0
    %v1905 = vadd.f32 %v1632, %v1904
    %v1906 = vpop.f32.mrb[0].mxu0
    %v1907 = vadd.f32 %v1634, %v1906
    %v1908 = vpop.f32.mrb[0].mxu0
    %v1909 = vadd.f32 %v1636, %v1908
    %v1910 = vpop.f32.mrb[0].mxu0
    %v1911 = vadd.f32 %v1638, %v1910
    %1912 = vmatprep.mubr.bf16.mxu0 %v602
    %1913 = vmatmul.mubr.bf16.gmra.mrb[0].mxu0 %v601
    %v1914 = vpop.f32.mrb[0].mxu0
    %v1915 = vadd.f32 %v1642, %v1914
    %v1916 = vpop.f32.mrb[0].mxu0
    %v1917 = vadd.f32 %v1644, %v1916
    %v1918 = vpop.f32.mrb[0].mxu0
    %v1919 = vadd.f32 %v1646, %v1918
    %v1920 = vpop.f32.mrb[0].mxu0
    %v1921 = vadd.f32 %v1648, %v1920
    %1922 = vmatprep.mubr.bf16.mxu0 %v610
    %1923 = vmatmul.mubr.bf16.gmra.mrb[0].mxu0 %v609
    %v1924 = vpop.f32.mrb[0].mxu0
    %v1925 = vadd.f32 %v1652, %v1924
    %v1926 = vpop.f32.mrb[0].mxu0
    %v1927 = vadd.f32 %v1654, %v1926
    %v1928 = vpop.f32.mrb[0].mxu0
    %v1929 = vadd.f32 %v1656, %v1928
    %v1930 = vpop.f32.mrb[0].mxu0
    %v1931 = vadd.f32 %v1658, %v1930
    %1932 = vmatprep.mubr.bf16.mxu0 %v618
    %1933 = vmatmul.mubr.bf16.gmra.mrb[0].mxu0 %v617
    %v1934 = vpop.f32.mrb[0].mxu0
    %v1935 = vadd.f32 %v1662, %v1934
    %v1936 = vpop.f32.mrb[0].mxu0
    %v1937 = vadd.f32 %v1664, %v1936
    %v1938 = vpop.f32.mrb[0].mxu0
    %v1939 = vadd.f32 %v1666, %v1938
    %v1940 = vpop.f32.mrb[0].mxu0
    %v1941 = vadd.f32 %v1668, %v1940
    %1942 = vmatprep.mubr.bf16.mxu0 %v626
    %1943 = vmatmul.mubr.bf16.gmra.mrb[0].mxu0 %v625
    %v1944 = vpop.f32.mrb[0].mxu0
    %v1945 = vadd.f32 %v1672, %v1944
    %v1946 = vpop.f32.mrb[0].mxu0
    %v1947 = vadd.f32 %v1674, %v1946
    %v1948 = vpop.f32.mrb[0].mxu0
    %v1949 = vadd.f32 %v1676, %v1948
    %v1950 = vpop.f32.mrb[0].mxu0
    %v1951 = vadd.f32 %v1678, %v1950
    %1952 = vmatprep.mubr.bf16.mxu0 %v634
    %1953 = vmatmul.mubr.bf16.gmra.mrb[0].mxu0 %v633
    %v1954 = vpop.f32.mrb[0].mxu0
    %v1955 = vadd.f32 %v1682, %v1954
    %v1956 = vpop.f32.mrb[0].mxu0
    %v1957 = vadd.f32 %v1684, %v1956
    %v1958 = vpop.f32.mrb[0].mxu0
    %v1959 = vadd.f32 %v1686, %v1958
    %v1960 = vpop.f32.mrb[0].mxu0
    %v1961 = vadd.f32 %v1688, %v1960
    %1962 = vmatprep.mubr.bf16.mxu0 %v642
    %1963 = vmatmul.mubr.bf16.gmra.mrb[0].mxu0 %v641
    %v1964 = vpop.f32.mrb[0].mxu0
    %v1965 = vadd.f32 %v1692, %v1964
    %v1966 = vpop.f32.mrb[0].mxu0
    %v1967 = vadd.f32 %v1694, %v1966
    %v1968 = vpop.f32.mrb[0].mxu0
    %v1969 = vadd.f32 %v1696, %v1968
    %v1970 = vpop.f32.mrb[0].mxu0
    %v1971 = vadd.f32 %v1698, %v1970
    %1972 = vdwg.mxu0
    %1973 = vmatprep.subr.bf16.mxu0 %v1236
    %1974 = vmatpush1.bf16.msra.mxu0 %v1235
    %1975 = vmatprep.subr.bf16.mxu0 %v1238
    %1976 = vmatpush1.bf16.msra.mxu0 %v1237
    %1977 = vmatprep.subr.bf16.mxu0 %v1240
    %1978 = vmatpush1.bf16.msra.mxu0 %v1239
    %1979 = vmatprep.subr.bf16.mxu0 %v1242
    %1980 = vmatpush1.bf16.msra.mxu0 %v1241
    %1981 = vmatprep.subr.bf16.mxu0 %v1244
    %1982 = vmatpush1.bf16.msra.mxu0 %v1243
    %1983 = vmatprep.subr.bf16.mxu0 %v1246
    %1984 = vmatpush1.bf16.msra.mxu0 %v1245
    %1985 = vmatprep.subr.bf16.mxu0 %v1248
    %1986 = vmatpush1.bf16.msra.mxu0 %v1247
    %1987 = vmatprep.subr.bf16.mxu0 %v1250
    %1988 = vmatpush1.bf16.msra.mxu0 %v1249
    %1989 = vmatprep.subr.bf16.mxu0 %v1252
    %1990 = vmatpush1.bf16.msra.mxu0 %v1251
    %1991 = vmatprep.subr.bf16.mxu0 %v1254
    %1992 = vmatpush1.bf16.msra.mxu0 %v1253
    %1993 = vmatprep.subr.bf16.mxu0 %v1256
    %1994 = vmatpush1.bf16.msra.mxu0 %v1255
    %1995 = vmatprep.subr.bf16.mxu0 %v1258
    %1996 = vmatpush1.bf16.msra.mxu0 %v1257
    %1997 = vmatprep.subr.bf16.mxu0 %v1260
    %1998 = vmatpush1.bf16.msra.mxu0 %v1259
    %1999 = vmatprep.subr.bf16.mxu0 %v1262
    %2000 = vmatpush1.bf16.msra.mxu0 %v1261
    %2001 = vmatprep.subr.bf16.mxu0 %v1264
    %2002 = vmatpush1.bf16.msra.mxu0 %v1263
    %2003 = vmatprep.subr.bf16.mxu0 %v1266
    %2004 = vmatpush1.bf16.msra.mxu0 %v1265
    %2005 = vmatprep.mubr.bf16.mxu0 %v460
    %2006 = vmatmul.mubr.bf16.gmra.mrb[0].mxu0 %v459
    %v2007 = vpop.f32.mrb[0].mxu0
    %v2008 = vadd.f32 %v1735, %v2007
    %v2009 = vpop.f32.mrb[0].mxu0
    %v2010 = vadd.f32 %v1737, %v2009
    %v2011 = vpop.f32.mrb[0].mxu0
    %v2012 = vadd.f32 %v1739, %v2011
    %v2013 = vpop.f32.mrb[0].mxu0
    %v2014 = vadd.f32 %v1741, %v2013
    %2015 = vmatprep.mubr.bf16.mxu0 %v468
    %2016 = vmatmul.mubr.bf16.gmra.mrb[0].mxu0 %v467
    %v2017 = vpop.f32.mrb[0].mxu0
    %v2018 = vadd.f32 %v1745, %v2017
    %v2019 = vpop.f32.mrb[0].mxu0
    %v2020 = vadd.f32 %v1747, %v2019
    %v2021 = vpop.f32.mrb[0].mxu0
    %v2022 = vadd.f32 %v1749, %v2021
    %v2023 = vpop.f32.mrb[0].mxu0
    %v2024 = vadd.f32 %v1751, %v2023
    %2025 = vmatprep.mubr.bf16.mxu0 %v476
    %2026 = vmatmul.mubr.bf16.gmra.mrb[0].mxu0 %v475
    %v2027 = vpop.f32.mrb[0].mxu0
    %v2028 = vadd.f32 %v1755, %v2027
    %v2029 = vpop.f32.mrb[0].mxu0
    %v2030 = vadd.f32 %v1757, %v2029
    %v2031 = vpop.f32.mrb[0].mxu0
    %v2032 = vadd.f32 %v1759, %v2031
    %v2033 = vpop.f32.mrb[0].mxu0
    %v2034 = vadd.f32 %v1761, %v2033
    %2035 = vmatprep.mubr.bf16.mxu0 %v484
    %2036 = vmatmul.mubr.bf16.gmra.mrb[0].mxu0 %v483
    %v2037 = vpop.f32.mrb[0].mxu0
    %v2038 = vadd.f32 %v1765, %v2037
    %v2039 = vpop.f32.mrb[0].mxu0
    %v2040 = vadd.f32 %v1767, %v2039
    %v2041 = vpop.f32.mrb[0].mxu0
    %v2042 = vadd.f32 %v1769, %v2041
    %v2043 = vpop.f32.mrb[0].mxu0
    %v2044 = vadd.f32 %v1771, %v2043
    %2045 = vmatprep.mubr.bf16.mxu0 %v492
    %2046 = vmatmul.mubr.bf16.gmra.mrb[0].mxu0 %v491
    %v2047 = vpop.f32.mrb[0].mxu0
    %v2048 = vadd.f32 %v1775, %v2047
    %v2049 = vpop.f32.mrb[0].mxu0
    %v2050 = vadd.f32 %v1777, %v2049
    %v2051 = vpop.f32.mrb[0].mxu0
    %v2052 = vadd.f32 %v1779, %v2051
    %v2053 = vpop.f32.mrb[0].mxu0
    %v2054 = vadd.f32 %v1781, %v2053
    %2055 = vmatprep.mubr.bf16.mxu0 %v500
    %2056 = vmatmul.mubr.bf16.gmra.mrb[0].mxu0 %v499
    %v2057 = vpop.f32.mrb[0].mxu0
    %v2058 = vadd.f32 %v1785, %v2057
    %v2059 = vpop.f32.mrb[0].mxu0
    %v2060 = vadd.f32 %v1787, %v2059
    %v2061 = vpop.f32.mrb[0].mxu0
    %v2062 = vadd.f32 %v1789, %v2061
    %v2063 = vpop.f32.mrb[0].mxu0
    %v2064 = vadd.f32 %v1791, %v2063
    %2065 = vmatprep.mubr.bf16.mxu0 %v508
    %2066 = vmatmul.mubr.bf16.gmra.mrb[0].mxu0 %v507
    %v2067 = vpop.f32.mrb[0].mxu0
    %v2068 = vadd.f32 %v1795, %v2067
    %v2069 = vpop.f32.mrb[0].mxu0
    %v2070 = vadd.f32 %v1797, %v2069
    %v2071 = vpop.f32.mrb[0].mxu0
    %v2072 = vadd.f32 %v1799, %v2071
    %v2073 = vpop.f32.mrb[0].mxu0
    %v2074 = vadd.f32 %v1801, %v2073
    %2075 = vmatprep.mubr.bf16.mxu0 %v516
    %2076 = vmatmul.mubr.bf16.gmra.mrb[0].mxu0 %v515
    %v2077 = vpop.f32.mrb[0].mxu0
    %v2078 = vadd.f32 %v1805, %v2077
    %v2079 = vpop.f32.mrb[0].mxu0
    %v2080 = vadd.f32 %v1807, %v2079
    %v2081 = vpop.f32.mrb[0].mxu0
    %v2082 = vadd.f32 %v1809, %v2081
    %v2083 = vpop.f32.mrb[0].mxu0
    %v2084 = vadd.f32 %v1811, %v2083
    %2085 = vmatprep.mubr.bf16.mxu0 %v524
    %2086 = vmatmul.mubr.bf16.gmra.mrb[0].mxu0 %v523
    %v2087 = vpop.f32.mrb[0].mxu0
    %v2088 = vadd.f32 %v1815, %v2087
    %v2089 = vpop.f32.mrb[0].mxu0
    %v2090 = vadd.f32 %v1817, %v2089
    %v2091 = vpop.f32.mrb[0].mxu0
    %v2092 = vadd.f32 %v1819, %v2091
    %v2093 = vpop.f32.mrb[0].mxu0
    %v2094 = vadd.f32 %v1821, %v2093
    %2095 = vmatprep.mubr.bf16.mxu0 %v532
    %2096 = vmatmul.mubr.bf16.gmra.mrb[0].mxu0 %v531
    %v2097 = vpop.f32.mrb[0].mxu0
    %v2098 = vadd.f32 %v1825, %v2097
    %v2099 = vpop.f32.mrb[0].mxu0
    %v2100 = vadd.f32 %v1827, %v2099
    %v2101 = vpop.f32.mrb[0].mxu0
    %v2102 = vadd.f32 %v1829, %v2101
    %v2103 = vpop.f32.mrb[0].mxu0
    %v2104 = vadd.f32 %v1831, %v2103
    %2105 = vmatprep.mubr.bf16.mxu0 %v540
    %2106 = vmatmul.mubr.bf16.gmra.mrb[0].mxu0 %v539
    %v2107 = vpop.f32.mrb[0].mxu0
    %v2108 = vadd.f32 %v1835, %v2107
    %v2109 = vpop.f32.mrb[0].mxu0
    %v2110 = vadd.f32 %v1837, %v2109
    %v2111 = vpop.f32.mrb[0].mxu0
    %v2112 = vadd.f32 %v1839, %v2111
    %v2113 = vpop.f32.mrb[0].mxu0
    %v2114 = vadd.f32 %v1841, %v2113
    %2115 = vmatprep.mubr.bf16.mxu0 %v548
    %2116 = vmatmul.mubr.bf16.gmra.mrb[0].mxu0 %v547
    %v2117 = vpop.f32.mrb[0].mxu0
    %v2118 = vadd.f32 %v1845, %v2117
    %v2119 = vpop.f32.mrb[0].mxu0
    %v2120 = vadd.f32 %v1847, %v2119
    %v2121 = vpop.f32.mrb[0].mxu0
    %v2122 = vadd.f32 %v1849, %v2121
    %v2123 = vpop.f32.mrb[0].mxu0
    %v2124 = vadd.f32 %v1851, %v2123
    %2125 = vmatprep.mubr.bf16.mxu0 %v556
    %2126 = vmatmul.mubr.bf16.gmra.mrb[0].mxu0 %v555
    %v2127 = vpop.f32.mrb[0].mxu0
    %v2128 = vadd.f32 %v1855, %v2127
    %v2129 = vpop.f32.mrb[0].mxu0
    %v2130 = vadd.f32 %v1857, %v2129
    %v2131 = vpop.f32.mrb[0].mxu0
    %v2132 = vadd.f32 %v1859, %v2131
    %v2133 = vpop.f32.mrb[0].mxu0
    %v2134 = vadd.f32 %v1861, %v2133
    %2135 = vmatprep.mubr.bf16.mxu0 %v564
    %2136 = vmatmul.mubr.bf16.gmra.mrb[0].mxu0 %v563
    %v2137 = vpop.f32.mrb[0].mxu0
    %v2138 = vadd.f32 %v1865, %v2137
    %v2139 = vpop.f32.mrb[0].mxu0
    %v2140 = vadd.f32 %v1867, %v2139
    %v2141 = vpop.f32.mrb[0].mxu0
    %v2142 = vadd.f32 %v1869, %v2141
    %v2143 = vpop.f32.mrb[0].mxu0
    %v2144 = vadd.f32 %v1871, %v2143
    %2145 = vmatprep.mubr.bf16.mxu0 %v572
    %2146 = vmatmul.mubr.bf16.gmra.mrb[0].mxu0 %v571
    %v2147 = vpop.f32.mrb[0].mxu0
    %v2148 = vadd.f32 %v1875, %v2147
    %v2149 = vpop.f32.mrb[0].mxu0
    %v2150 = vadd.f32 %v1877, %v2149
    %v2151 = vpop.f32.mrb[0].mxu0
    %v2152 = vadd.f32 %v1879, %v2151
    %v2153 = vpop.f32.mrb[0].mxu0
    %v2154 = vadd.f32 %v1881, %v2153
    %2155 = vmatprep.mubr.bf16.mxu0 %v580
    %2156 = vmatmul.mubr.bf16.gmra.mrb[0].mxu0 %v579
    %v2157 = vpop.f32.mrb[0].mxu0
    %v2158 = vadd.f32 %v1885, %v2157
    %v2159 = vpop.f32.mrb[0].mxu0
    %v2160 = vadd.f32 %v1887, %v2159
    %v2161 = vpop.f32.mrb[0].mxu0
    %v2162 = vadd.f32 %v1889, %v2161
    %v2163 = vpop.f32.mrb[0].mxu0
    %v2164 = vadd.f32 %v1891, %v2163
    %2165 = vmatprep.mubr.bf16.mxu0 %v588
    %2166 = vmatmul.mubr.bf16.gmra.mrb[0].mxu0 %v587
    %v2167 = vpop.f32.mrb[0].mxu0
    %v2168 = vadd.f32 %v1895, %v2167
    %v2169 = vpop.f32.mrb[0].mxu0
    %v2170 = vadd.f32 %v1897, %v2169
    %v2171 = vpop.f32.mrb[0].mxu0
    %v2172 = vadd.f32 %v1899, %v2171
    %v2173 = vpop.f32.mrb[0].mxu0
    %v2174 = vadd.f32 %v1901, %v2173
    %2175 = vmatprep.mubr.bf16.mxu0 %v596
    %2176 = vmatmul.mubr.bf16.gmra.mrb[0].mxu0 %v595
    %v2177 = vpop.f32.mrb[0].mxu0
    %v2178 = vadd.f32 %v1905, %v2177
    %v2179 = vpop.f32.mrb[0].mxu0
    %v2180 = vadd.f32 %v1907, %v2179
    %v2181 = vpop.f32.mrb[0].mxu0
    %v2182 = vadd.f32 %v1909, %v2181
    %v2183 = vpop.f32.mrb[0].mxu0
    %v2184 = vadd.f32 %v1911, %v2183
    %2185 = vmatprep.mubr.bf16.mxu0 %v604
    %2186 = vmatmul.mubr.bf16.gmra.mrb[0].mxu0 %v603
    %v2187 = vpop.f32.mrb[0].mxu0
    %v2188 = vadd.f32 %v1915, %v2187
    %v2189 = vpop.f32.mrb[0].mxu0
    %v2190 = vadd.f32 %v1917, %v2189
    %v2191 = vpop.f32.mrb[0].mxu0
    %v2192 = vadd.f32 %v1919, %v2191
    %v2193 = vpop.f32.mrb[0].mxu0
    %v2194 = vadd.f32 %v1921, %v2193
    %2195 = vmatprep.mubr.bf16.mxu0 %v612
    %2196 = vmatmul.mubr.bf16.gmra.mrb[0].mxu0 %v611
    %v2197 = vpop.f32.mrb[0].mxu0
    %v2198 = vadd.f32 %v1925, %v2197
    %v2199 = vpop.f32.mrb[0].mxu0
    %v2200 = vadd.f32 %v1927, %v2199
    %v2201 = vpop.f32.mrb[0].mxu0
    %v2202 = vadd.f32 %v1929, %v2201
    %v2203 = vpop.f32.mrb[0].mxu0
    %v2204 = vadd.f32 %v1931, %v2203
    %2205 = vmatprep.mubr.bf16.mxu0 %v620
    %2206 = vmatmul.mubr.bf16.gmra.mrb[0].mxu0 %v619
    %v2207 = vpop.f32.mrb[0].mxu0
    %v2208 = vadd.f32 %v1935, %v2207
    %v2209 = vpop.f32.mrb[0].mxu0
    %v2210 = vadd.f32 %v1937, %v2209
    %v2211 = vpop.f32.mrb[0].mxu0
    %v2212 = vadd.f32 %v1939, %v2211
    %v2213 = vpop.f32.mrb[0].mxu0
    %v2214 = vadd.f32 %v1941, %v2213
    %2215 = vmatprep.mubr.bf16.mxu0 %v628
    %2216 = vmatmul.mubr.bf16.gmra.mrb[0].mxu0 %v627
    %v2217 = vpop.f32.mrb[0].mxu0
    %v2218 = vadd.f32 %v1945, %v2217
    %v2219 = vpop.f32.mrb[0].mxu0
    %v2220 = vadd.f32 %v1947, %v2219
    %v2221 = vpop.f32.mrb[0].mxu0
    %v2222 = vadd.f32 %v1949, %v2221
    %v2223 = vpop.f32.mrb[0].mxu0
    %v2224 = vadd.f32 %v1951, %v2223
    %2225 = vmatprep.mubr.bf16.mxu0 %v636
    %2226 = vmatmul.mubr.bf16.gmra.mrb[0].mxu0 %v635
    %v2227 = vpop.f32.mrb[0].mxu0
    %v2228 = vadd.f32 %v1955, %v2227
    %v2229 = vpop.f32.mrb[0].mxu0
    %v2230 = vadd.f32 %v1957, %v2229
    %v2231 = vpop.f32.mrb[0].mxu0
    %v2232 = vadd.f32 %v1959, %v2231
    %v2233 = vpop.f32.mrb[0].mxu0
    %v2234 = vadd.f32 %v1961, %v2233
    %2235 = vmatprep.mubr.bf16.mxu0 %v644
    %2236 = vmatmul.mubr.bf16.gmra.mrb[0].mxu0 %v643
    %v2237 = vpop.f32.mrb[0].mxu0
    %v2238 = vadd.f32 %v1965, %v2237
    %v2239 = vpop.f32.mrb[0].mxu0
    %v2240 = vadd.f32 %v1967, %v2239
    %v2241 = vpop.f32.mrb[0].mxu0
    %v2242 = vadd.f32 %v1969, %v2241
    %v2243 = vpop.f32.mrb[0].mxu0
    %v2244 = vadd.f32 %v1971, %v2243
    %2245 = vdwg.mxu0
    %2246 = vmatprep.subr.bf16.mxu0 %v1268
    %2247 = vmatpush1.bf16.msra.mxu0 %v1267
    %2248 = vmatprep.subr.bf16.mxu0 %v1270
    %2249 = vmatpush1.bf16.msra.mxu0 %v1269
    %2250 = vmatprep.subr.bf16.mxu0 %v1272
    %2251 = vmatpush1.bf16.msra.mxu0 %v1271
    %2252 = vmatprep.subr.bf16.mxu0 %v1274
    %2253 = vmatpush1.bf16.msra.mxu0 %v1273
    %2254 = vmatprep.subr.bf16.mxu0 %v1276
    %2255 = vmatpush1.bf16.msra.mxu0 %v1275
    %2256 = vmatprep.subr.bf16.mxu0 %v1278
    %2257 = vmatpush1.bf16.msra.mxu0 %v1277
    %2258 = vmatprep.subr.bf16.mxu0 %v1280
    %2259 = vmatpush1.bf16.msra.mxu0 %v1279
    %2260 = vmatprep.subr.bf16.mxu0 %v1282
    %2261 = vmatpush1.bf16.msra.mxu0 %v1281
    %2262 = vmatprep.subr.bf16.mxu0 %v1284
    %2263 = vmatpush1.bf16.msra.mxu0 %v1283
    %2264 = vmatprep.subr.bf16.mxu0 %v1286
    %2265 = vmatpush1.bf16.msra.mxu0 %v1285
    %2266 = vmatprep.subr.bf16.mxu0 %v1288
    %2267 = vmatpush1.bf16.msra.mxu0 %v1287
    %2268 = vmatprep.subr.bf16.mxu0 %v1290
    %2269 = vmatpush1.bf16.msra.mxu0 %v1289
    %2270 = vmatprep.subr.bf16.mxu0 %v1292
    %2271 = vmatpush1.bf16.msra.mxu0 %v1291
    %2272 = vmatprep.subr.bf16.mxu0 %v1294
    %2273 = vmatpush1.bf16.msra.mxu0 %v1293
    %2274 = vmatprep.subr.bf16.mxu0 %v1296
    %2275 = vmatpush1.bf16.msra.mxu0 %v1295
    %2276 = vmatprep.subr.bf16.mxu0 %v1298
    %2277 = vmatpush1.bf16.msra.mxu0 %v1297
    %2278 = vmatprep.mubr.bf16.mxu0 %v462
    %2279 = vmatmul.mubr.bf16.gmra.mrb[0].mxu0 %v461
    %v2280 = vpop.f32.mrb[0].mxu0
    %v2281 = vadd.f32 %v2008, %v2280
    %v2282 = vpop.f32.mrb[0].mxu0
    %v2283 = vadd.f32 %v2010, %v2282
    %v2284 = vpop.f32.mrb[0].mxu0
    %v2285 = vadd.f32 %v2012, %v2284
    %v2286 = vpop.f32.mrb[0].mxu0
    %v2287 = vadd.f32 %v2014, %v2286
    %2288 = vmatprep.mubr.bf16.mxu0 %v470
    %2289 = vmatmul.mubr.bf16.gmra.mrb[0].mxu0 %v469
    %v2290 = vpop.f32.mrb[0].mxu0
    %v2291 = vadd.f32 %v2018, %v2290
    %v2292 = vpop.f32.mrb[0].mxu0
    %v2293 = vadd.f32 %v2020, %v2292
    %v2294 = vpop.f32.mrb[0].mxu0
    %v2295 = vadd.f32 %v2022, %v2294
    %v2296 = vpop.f32.mrb[0].mxu0
    %v2297 = vadd.f32 %v2024, %v2296
    %2298 = vmatprep.mubr.bf16.mxu0 %v478
    %2299 = vmatmul.mubr.bf16.gmra.mrb[0].mxu0 %v477
    %v2300 = vpop.f32.mrb[0].mxu0
    %v2301 = vadd.f32 %v2028, %v2300
    %v2302 = vpop.f32.mrb[0].mxu0
    %v2303 = vadd.f32 %v2030, %v2302
    %v2304 = vpop.f32.mrb[0].mxu0
    %v2305 = vadd.f32 %v2032, %v2304
    %v2306 = vpop.f32.mrb[0].mxu0
    %v2307 = vadd.f32 %v2034, %v2306
    %2308 = vmatprep.mubr.bf16.mxu0 %v486
    %2309 = vmatmul.mubr.bf16.gmra.mrb[0].mxu0 %v485
    %v2310 = vpop.f32.mrb[0].mxu0
    %v2311 = vadd.f32 %v2038, %v2310
    %v2312 = vpop.f32.mrb[0].mxu0
    %v2313 = vadd.f32 %v2040, %v2312
    %v2314 = vpop.f32.mrb[0].mxu0
    %v2315 = vadd.f32 %v2042, %v2314
    %v2316 = vpop.f32.mrb[0].mxu0
    %v2317 = vadd.f32 %v2044, %v2316
    %2318 = vmatprep.mubr.bf16.mxu0 %v494
    %2319 = vmatmul.mubr.bf16.gmra.mrb[0].mxu0 %v493
    %v2320 = vpop.f32.mrb[0].mxu0
    %v2321 = vadd.f32 %v2048, %v2320
    %v2322 = vpop.f32.mrb[0].mxu0
    %v2323 = vadd.f32 %v2050, %v2322
    %v2324 = vpop.f32.mrb[0].mxu0
    %v2325 = vadd.f32 %v2052, %v2324
    %v2326 = vpop.f32.mrb[0].mxu0
    %v2327 = vadd.f32 %v2054, %v2326
    %2328 = vmatprep.mubr.bf16.mxu0 %v502
    %2329 = vmatmul.mubr.bf16.gmra.mrb[0].mxu0 %v501
    %v2330 = vpop.f32.mrb[0].mxu0
    %v2331 = vadd.f32 %v2058, %v2330
    %v2332 = vpop.f32.mrb[0].mxu0
    %v2333 = vadd.f32 %v2060, %v2332
    %v2334 = vpop.f32.mrb[0].mxu0
    %v2335 = vadd.f32 %v2062, %v2334
    %v2336 = vpop.f32.mrb[0].mxu0
    %v2337 = vadd.f32 %v2064, %v2336
    %2338 = vmatprep.mubr.bf16.mxu0 %v510
    %2339 = vmatmul.mubr.bf16.gmra.mrb[0].mxu0 %v509
    %v2340 = vpop.f32.mrb[0].mxu0
    %v2341 = vadd.f32 %v2068, %v2340
    %v2342 = vpop.f32.mrb[0].mxu0
    %v2343 = vadd.f32 %v2070, %v2342
    %v2344 = vpop.f32.mrb[0].mxu0
    %v2345 = vadd.f32 %v2072, %v2344
    %v2346 = vpop.f32.mrb[0].mxu0
    %v2347 = vadd.f32 %v2074, %v2346
    %2348 = vmatprep.mubr.bf16.mxu0 %v518
    %2349 = vmatmul.mubr.bf16.gmra.mrb[0].mxu0 %v517
    %v2350 = vpop.f32.mrb[0].mxu0
    %v2351 = vadd.f32 %v2078, %v2350
    %v2352 = vpop.f32.mrb[0].mxu0
    %v2353 = vadd.f32 %v2080, %v2352
    %v2354 = vpop.f32.mrb[0].mxu0
    %v2355 = vadd.f32 %v2082, %v2354
    %v2356 = vpop.f32.mrb[0].mxu0
    %v2357 = vadd.f32 %v2084, %v2356
    %2358 = vmatprep.mubr.bf16.mxu0 %v526
    %2359 = vmatmul.mubr.bf16.gmra.mrb[0].mxu0 %v525
    %v2360 = vpop.f32.mrb[0].mxu0
    %v2361 = vadd.f32 %v2088, %v2360
    %v2362 = vpop.f32.mrb[0].mxu0
    %v2363 = vadd.f32 %v2090, %v2362
    %v2364 = vpop.f32.mrb[0].mxu0
    %v2365 = vadd.f32 %v2092, %v2364
    %v2366 = vpop.f32.mrb[0].mxu0
    %v2367 = vadd.f32 %v2094, %v2366
    %2368 = vmatprep.mubr.bf16.mxu0 %v534
    %2369 = vmatmul.mubr.bf16.gmra.mrb[0].mxu0 %v533
    %v2370 = vpop.f32.mrb[0].mxu0
    %v2371 = vadd.f32 %v2098, %v2370
    %v2372 = vpop.f32.mrb[0].mxu0
    %v2373 = vadd.f32 %v2100, %v2372
    %v2374 = vpop.f32.mrb[0].mxu0
    %v2375 = vadd.f32 %v2102, %v2374
    %v2376 = vpop.f32.mrb[0].mxu0
    %v2377 = vadd.f32 %v2104, %v2376
    %2378 = vmatprep.mubr.bf16.mxu0 %v542
    %2379 = vmatmul.mubr.bf16.gmra.mrb[0].mxu0 %v541
    %v2380 = vpop.f32.mrb[0].mxu0
    %v2381 = vadd.f32 %v2108, %v2380
    %v2382 = vpop.f32.mrb[0].mxu0
    %v2383 = vadd.f32 %v2110, %v2382
    %v2384 = vpop.f32.mrb[0].mxu0
    %v2385 = vadd.f32 %v2112, %v2384
    %v2386 = vpop.f32.mrb[0].mxu0
    %v2387 = vadd.f32 %v2114, %v2386
    %2388 = vmatprep.mubr.bf16.mxu0 %v550
    %2389 = vmatmul.mubr.bf16.gmra.mrb[0].mxu0 %v549
    %v2390 = vpop.f32.mrb[0].mxu0
    %v2391 = vadd.f32 %v2118, %v2390
    %v2392 = vpop.f32.mrb[0].mxu0
    %v2393 = vadd.f32 %v2120, %v2392
    %v2394 = vpop.f32.mrb[0].mxu0
    %v2395 = vadd.f32 %v2122, %v2394
    %v2396 = vpop.f32.mrb[0].mxu0
    %v2397 = vadd.f32 %v2124, %v2396
    %2398 = vmatprep.mubr.bf16.mxu0 %v558
    %2399 = vmatmul.mubr.bf16.gmra.mrb[0].mxu0 %v557
    %v2400 = vpop.f32.mrb[0].mxu0
    %v2401 = vadd.f32 %v2128, %v2400
    %v2402 = vpop.f32.mrb[0].mxu0
    %v2403 = vadd.f32 %v2130, %v2402
    %v2404 = vpop.f32.mrb[0].mxu0
    %v2405 = vadd.f32 %v2132, %v2404
    %v2406 = vpop.f32.mrb[0].mxu0
    %v2407 = vadd.f32 %v2134, %v2406
    %2408 = vmatprep.mubr.bf16.mxu0 %v566
    %2409 = vmatmul.mubr.bf16.gmra.mrb[0].mxu0 %v565
    %v2410 = vpop.f32.mrb[0].mxu0
    %v2411 = vadd.f32 %v2138, %v2410
    %v2412 = vpop.f32.mrb[0].mxu0
    %v2413 = vadd.f32 %v2140, %v2412
    %v2414 = vpop.f32.mrb[0].mxu0
    %v2415 = vadd.f32 %v2142, %v2414
    %v2416 = vpop.f32.mrb[0].mxu0
    %v2417 = vadd.f32 %v2144, %v2416
    %2418 = vmatprep.mubr.bf16.mxu0 %v574
    %2419 = vmatmul.mubr.bf16.gmra.mrb[0].mxu0 %v573
    %v2420 = vpop.f32.mrb[0].mxu0
    %v2421 = vadd.f32 %v2148, %v2420
    %v2422 = vpop.f32.mrb[0].mxu0
    %v2423 = vadd.f32 %v2150, %v2422
    %v2424 = vpop.f32.mrb[0].mxu0
    %v2425 = vadd.f32 %v2152, %v2424
    %v2426 = vpop.f32.mrb[0].mxu0
    %v2427 = vadd.f32 %v2154, %v2426
    %2428 = vmatprep.mubr.bf16.mxu0 %v582
    %2429 = vmatmul.mubr.bf16.gmra.mrb[0].mxu0 %v581
    %v2430 = vpop.f32.mrb[0].mxu0
    %v2431 = vadd.f32 %v2158, %v2430
    %v2432 = vpop.f32.mrb[0].mxu0
    %v2433 = vadd.f32 %v2160, %v2432
    %v2434 = vpop.f32.mrb[0].mxu0
    %v2435 = vadd.f32 %v2162, %v2434
    %v2436 = vpop.f32.mrb[0].mxu0
    %v2437 = vadd.f32 %v2164, %v2436
    %2438 = vmatprep.mubr.bf16.mxu0 %v590
    %2439 = vmatmul.mubr.bf16.gmra.mrb[0].mxu0 %v589
    %v2440 = vpop.f32.mrb[0].mxu0
    %v2441 = vadd.f32 %v2168, %v2440
    %v2442 = vpop.f32.mrb[0].mxu0
    %v2443 = vadd.f32 %v2170, %v2442
    %v2444 = vpop.f32.mrb[0].mxu0
    %v2445 = vadd.f32 %v2172, %v2444
    %v2446 = vpop.f32.mrb[0].mxu0
    %v2447 = vadd.f32 %v2174, %v2446
    %2448 = vmatprep.mubr.bf16.mxu0 %v598
    %2449 = vmatmul.mubr.bf16.gmra.mrb[0].mxu0 %v597
    %v2450 = vpop.f32.mrb[0].mxu0
    %v2451 = vadd.f32 %v2178, %v2450
    %v2452 = vpop.f32.mrb[0].mxu0
    %v2453 = vadd.f32 %v2180, %v2452
    %v2454 = vpop.f32.mrb[0].mxu0
    %v2455 = vadd.f32 %v2182, %v2454
    %v2456 = vpop.f32.mrb[0].mxu0
    %v2457 = vadd.f32 %v2184, %v2456
    %2458 = vmatprep.mubr.bf16.mxu0 %v606
    %2459 = vmatmul.mubr.bf16.gmra.mrb[0].mxu0 %v605
    %v2460 = vpop.f32.mrb[0].mxu0
    %v2461 = vadd.f32 %v2188, %v2460
    %v2462 = vpop.f32.mrb[0].mxu0
    %v2463 = vadd.f32 %v2190, %v2462
    %v2464 = vpop.f32.mrb[0].mxu0
    %v2465 = vadd.f32 %v2192, %v2464
    %v2466 = vpop.f32.mrb[0].mxu0
    %v2467 = vadd.f32 %v2194, %v2466
    %2468 = vmatprep.mubr.bf16.mxu0 %v614
    %2469 = vmatmul.mubr.bf16.gmra.mrb[0].mxu0 %v613
    %v2470 = vpop.f32.mrb[0].mxu0
    %v2471 = vadd.f32 %v2198, %v2470
    %v2472 = vpop.f32.mrb[0].mxu0
    %v2473 = vadd.f32 %v2200, %v2472
    %v2474 = vpop.f32.mrb[0].mxu0
    %v2475 = vadd.f32 %v2202, %v2474
    %v2476 = vpop.f32.mrb[0].mxu0
    %v2477 = vadd.f32 %v2204, %v2476
    %2478 = vmatprep.mubr.bf16.mxu0 %v622
    %2479 = vmatmul.mubr.bf16.gmra.mrb[0].mxu0 %v621
    %v2480 = vpop.f32.mrb[0].mxu0
    %v2481 = vadd.f32 %v2208, %v2480
    %v2482 = vpop.f32.mrb[0].mxu0
    %v2483 = vadd.f32 %v2210, %v2482
    %v2484 = vpop.f32.mrb[0].mxu0
    %v2485 = vadd.f32 %v2212, %v2484
    %v2486 = vpop.f32.mrb[0].mxu0
    %v2487 = vadd.f32 %v2214, %v2486
    %2488 = vmatprep.mubr.bf16.mxu0 %v630
    %2489 = vmatmul.mubr.bf16.gmra.mrb[0].mxu0 %v629
    %v2490 = vpop.f32.mrb[0].mxu0
    %v2491 = vadd.f32 %v2218, %v2490
    %v2492 = vpop.f32.mrb[0].mxu0
    %v2493 = vadd.f32 %v2220, %v2492
    %v2494 = vpop.f32.mrb[0].mxu0
    %v2495 = vadd.f32 %v2222, %v2494
    %v2496 = vpop.f32.mrb[0].mxu0
    %v2497 = vadd.f32 %v2224, %v2496
    %2498 = vmatprep.mubr.bf16.mxu0 %v638
    %2499 = vmatmul.mubr.bf16.gmra.mrb[0].mxu0 %v637
    %v2500 = vpop.f32.mrb[0].mxu0
    %v2501 = vadd.f32 %v2228, %v2500
    %v2502 = vpop.f32.mrb[0].mxu0
    %v2503 = vadd.f32 %v2230, %v2502
    %v2504 = vpop.f32.mrb[0].mxu0
    %v2505 = vadd.f32 %v2232, %v2504
    %v2506 = vpop.f32.mrb[0].mxu0
    %v2507 = vadd.f32 %v2234, %v2506
    %2508 = vmatprep.mubr.bf16.mxu0 %v646
    %2509 = vmatmul.mubr.bf16.gmra.mrb[0].mxu0 %v645
    %v2510 = vpop.f32.mrb[0].mxu0
    %v2511 = vadd.f32 %v2238, %v2510
    %v2512 = vpop.f32.mrb[0].mxu0
    %v2513 = vadd.f32 %v2240, %v2512
    %v2514 = vpop.f32.mrb[0].mxu0
    %v2515 = vadd.f32 %v2242, %v2514
    %v2516 = vpop.f32.mrb[0].mxu0
    %v2517 = vadd.f32 %v2244, %v2516
    %2518 = vdwg.mxu0
    %v2519 = vld [vmem:[#allocation8] sm:$0xff]
    %v2520 = vld [vmem:[#allocation8 + $0x8] sm:$0xff]
    %v2521 = vld [vmem:[#allocation8 + $0x10] sm:$0xff]
    %v2522 = vld [vmem:[#allocation8 + $0x18] sm:$0xff]
    %v2523 = vld [vmem:[#allocation8 + $0x20] sm:$0xff]
    %v2524 = vld [vmem:[#allocation8 + $0x28] sm:$0xff]
    %v2525 = vld [vmem:[#allocation8 + $0x30] sm:$0xff]
    %v2526 = vld [vmem:[#allocation8 + $0x38] sm:$0xff]
    %v2527 = vld [vmem:[#allocation8 + $0x40] sm:$0xff]
    %v2528 = vld [vmem:[#allocation8 + $0x48] sm:$0xff]
    %v2529 = vld [vmem:[#allocation8 + $0x50] sm:$0xff]
    %v2530 = vld [vmem:[#allocation8 + $0x58] sm:$0xff]
    %v2531 = vld [vmem:[#allocation8 + $0x60] sm:$0xff]
    %v2532 = vld [vmem:[#allocation8 + $0x68] sm:$0xff]
    %v2533 = vld [vmem:[#allocation8 + $0x70] sm:$0xff]
    %v2534 = vld [vmem:[#allocation8 + $0x78] sm:$0xff]
    %v2535 = vld [vmem:[#allocation8 + $0x80] sm:$0xff]
    %v2536 = vld [vmem:[#allocation8 + $0x88] sm:$0xff]
    %v2537 = vld [vmem:[#allocation8 + $0x90] sm:$0xff]
    %v2538 = vld [vmem:[#allocation8 + $0x98] sm:$0xff]
    %v2539 = vld [vmem:[#allocation8 + $0xa0] sm:$0xff]
    %v2540 = vld [vmem:[#allocation8 + $0xa8] sm:$0xff]
    %v2541 = vld [vmem:[#allocation8 + $0xb0] sm:$0xff]
    %v2542 = vld [vmem:[#allocation8 + $0xb8] sm:$0xff]
    %v2543 = vld [vmem:[#allocation8 + $0xc0] sm:$0xff]
    %v2544 = vld [vmem:[#allocation8 + $0xc8] sm:$0xff]
    %v2545 = vld [vmem:[#allocation8 + $0xd0] sm:$0xff]
    %v2546 = vld [vmem:[#allocation8 + $0xd8] sm:$0xff]
    %v2547 = vld [vmem:[#allocation8 + $0xe0] sm:$0xff]
    %v2548 = vld [vmem:[#allocation8 + $0xe8] sm:$0xff]
    %v2549 = vld [vmem:[#allocation8 + $0xf0] sm:$0xff]
    %v2550 = vld [vmem:[#allocation8 + $0xf8] sm:$0xff]
    %v2551 = vld [vmem:[#allocation8 + $0x100] sm:$0xff]
    %v2552 = vld [vmem:[#allocation8 + $0x108] sm:$0xff]
    %v2553 = vld [vmem:[#allocation8 + $0x110] sm:$0xff]
    %v2554 = vld [vmem:[#allocation8 + $0x118] sm:$0xff]
    %v2555 = vld [vmem:[#allocation8 + $0x120] sm:$0xff]
    %v2556 = vld [vmem:[#allocation8 + $0x128] sm:$0xff]
    %v2557 = vld [vmem:[#allocation8 + $0x130] sm:$0xff]
    %v2558 = vld [vmem:[#allocation8 + $0x138] sm:$0xff]
    %v2559 = vld [vmem:[#allocation8 + $0x140] sm:$0xff]
    %v2560 = vld [vmem:[#allocation8 + $0x148] sm:$0xff]
    %v2561 = vld [vmem:[#allocation8 + $0x150] sm:$0xff]
    %v2562 = vld [vmem:[#allocation8 + $0x158] sm:$0xff]
    %v2563 = vld [vmem:[#allocation8 + $0x160] sm:$0xff]
    %v2564 = vld [vmem:[#allocation8 + $0x168] sm:$0xff]
    %v2565 = vld [vmem:[#allocation8 + $0x170] sm:$0xff]
    %v2566 = vld [vmem:[#allocation8 + $0x178] sm:$0xff]
    %v2567 = vld [vmem:[#allocation8 + $0x180] sm:$0xff]
    %v2568 = vld [vmem:[#allocation8 + $0x188] sm:$0xff]
    %v2569 = vld [vmem:[#allocation8 + $0x190] sm:$0xff]
    %v2570 = vld [vmem:[#allocation8 + $0x198] sm:$0xff]
    %v2571 = vld [vmem:[#allocation8 + $0x1a0] sm:$0xff]
    %v2572 = vld [vmem:[#allocation8 + $0x1a8] sm:$0xff]
    %v2573 = vld [vmem:[#allocation8 + $0x1b0] sm:$0xff]
    %v2574 = vld [vmem:[#allocation8 + $0x1b8] sm:$0xff]
    %v2575 = vld [vmem:[#allocation8 + $0x1c0] sm:$0xff]
    %v2576 = vld [vmem:[#allocation8 + $0x1c8] sm:$0xff]
    %v2577 = vld [vmem:[#allocation8 + $0x1d0] sm:$0xff]
    %v2578 = vld [vmem:[#allocation8 + $0x1d8] sm:$0xff]
    %v2579 = vld [vmem:[#allocation8 + $0x1e0] sm:$0xff]
    %v2580 = vld [vmem:[#allocation8 + $0x1e8] sm:$0xff]
    %v2581 = vld [vmem:[#allocation8 + $0x1f0] sm:$0xff]
    %v2582 = vld [vmem:[#allocation8 + $0x1f8] sm:$0xff]
    %v2583 = vld [vmem:[#allocation8 + $0x200] sm:$0xff]
    %v2584 = vld [vmem:[#allocation8 + $0x208] sm:$0xff]
    %v2585 = vld [vmem:[#allocation8 + $0x210] sm:$0xff]
    %v2586 = vld [vmem:[#allocation8 + $0x218] sm:$0xff]
    %v2587 = vld [vmem:[#allocation8 + $0x220] sm:$0xff]
    %v2588 = vld [vmem:[#allocation8 + $0x228] sm:$0xff]
    %v2589 = vld [vmem:[#allocation8 + $0x230] sm:$0xff]
    %v2590 = vld [vmem:[#allocation8 + $0x238] sm:$0xff]
    %v2591 = vld [vmem:[#allocation8 + $0x240] sm:$0xff]
    %v2592 = vld [vmem:[#allocation8 + $0x248] sm:$0xff]
    %v2593 = vld [vmem:[#allocation8 + $0x250] sm:$0xff]
    %v2594 = vld [vmem:[#allocation8 + $0x258] sm:$0xff]
    %v2595 = vld [vmem:[#allocation8 + $0x260] sm:$0xff]
    %v2596 = vld [vmem:[#allocation8 + $0x268] sm:$0xff]
    %v2597 = vld [vmem:[#allocation8 + $0x270] sm:$0xff]
    %v2598 = vld [vmem:[#allocation8 + $0x278] sm:$0xff]
    %v2599 = vld [vmem:[#allocation8 + $0x280] sm:$0xff]
    %v2600 = vld [vmem:[#allocation8 + $0x288] sm:$0xff]
    %v2601 = vld [vmem:[#allocation8 + $0x290] sm:$0xff]
    %v2602 = vld [vmem:[#allocation8 + $0x298] sm:$0xff]
    %v2603 = vld [vmem:[#allocation8 + $0x2a0] sm:$0xff]
    %v2604 = vld [vmem:[#allocation8 + $0x2a8] sm:$0xff]
    %v2605 = vld [vmem:[#allocation8 + $0x2b0] sm:$0xff]
    %v2606 = vld [vmem:[#allocation8 + $0x2b8] sm:$0xff]
    %v2607 = vld [vmem:[#allocation8 + $0x2c0] sm:$0xff]
    %v2608 = vld [vmem:[#allocation8 + $0x2c8] sm:$0xff]
    %v2609 = vld [vmem:[#allocation8 + $0x2d0] sm:$0xff]
    %v2610 = vld [vmem:[#allocation8 + $0x2d8] sm:$0xff]
    %v2611 = vld [vmem:[#allocation8 + $0x2e0] sm:$0xff]
    %v2612 = vld [vmem:[#allocation8 + $0x2e8] sm:$0xff]
    %v2613 = vld [vmem:[#allocation8 + $0x2f0] sm:$0xff]
    %v2614 = vld [vmem:[#allocation8 + $0x2f8] sm:$0xff]
    %v2615 = vadd.f32 %v2281, %v2519
    %v2616 = vadd.f32 %v2283, %v2520
    %v2617 = vadd.f32 %v2285, %v2521
    %v2618 = vadd.f32 %v2287, %v2522
    %v2619 = vadd.f32 %v2291, %v2523
    %v2620 = vadd.f32 %v2293, %v2524
    %v2621 = vadd.f32 %v2295, %v2525
    %v2622 = vadd.f32 %v2297, %v2526
    %v2623 = vadd.f32 %v2301, %v2527
    %v2624 = vadd.f32 %v2303, %v2528
    %v2625 = vadd.f32 %v2305, %v2529
    %v2626 = vadd.f32 %v2307, %v2530
    %v2627 = vadd.f32 %v2311, %v2531
    %v2628 = vadd.f32 %v2313, %v2532
    %v2629 = vadd.f32 %v2315, %v2533
    %v2630 = vadd.f32 %v2317, %v2534
    %v2631 = vadd.f32 %v2321, %v2535
    %v2632 = vadd.f32 %v2323, %v2536
    %v2633 = vadd.f32 %v2325, %v2537
    %v2634 = vadd.f32 %v2327, %v2538
    %v2635 = vadd.f32 %v2331, %v2539
    %v2636 = vadd.f32 %v2333, %v2540
    %v2637 = vadd.f32 %v2335, %v2541
    %v2638 = vadd.f32 %v2337, %v2542
    %v2639 = vadd.f32 %v2341, %v2543
    %v2640 = vadd.f32 %v2343, %v2544
    %v2641 = vadd.f32 %v2345, %v2545
    %v2642 = vadd.f32 %v2347, %v2546
    %v2643 = vadd.f32 %v2351, %v2547
    %v2644 = vadd.f32 %v2353, %v2548
    %v2645 = vadd.f32 %v2355, %v2549
    %v2646 = vadd.f32 %v2357, %v2550
    %v2647 = vadd.f32 %v2361, %v2551
    %v2648 = vadd.f32 %v2363, %v2552
    %v2649 = vadd.f32 %v2365, %v2553
    %v2650 = vadd.f32 %v2367, %v2554
    %v2651 = vadd.f32 %v2371, %v2555
    %v2652 = vadd.f32 %v2373, %v2556
    %v2653 = vadd.f32 %v2375, %v2557
    %v2654 = vadd.f32 %v2377, %v2558
    %v2655 = vadd.f32 %v2381, %v2559
    %v2656 = vadd.f32 %v2383, %v2560
    %v2657 = vadd.f32 %v2385, %v2561
    %v2658 = vadd.f32 %v2387, %v2562
    %v2659 = vadd.f32 %v2391, %v2563
    %v2660 = vadd.f32 %v2393, %v2564
    %v2661 = vadd.f32 %v2395, %v2565
    %v2662 = vadd.f32 %v2397, %v2566
    %v2663 = vadd.f32 %v2401, %v2567
    %v2664 = vadd.f32 %v2403, %v2568
    %v2665 = vadd.f32 %v2405, %v2569
    %v2666 = vadd.f32 %v2407, %v2570
    %v2667 = vadd.f32 %v2411, %v2571
    %v2668 = vadd.f32 %v2413, %v2572
    %v2669 = vadd.f32 %v2415, %v2573
    %v2670 = vadd.f32 %v2417, %v2574
    %v2671 = vadd.f32 %v2421, %v2575
    %v2672 = vadd.f32 %v2423, %v2576
    %v2673 = vadd.f32 %v2425, %v2577
    %v2674 = vadd.f32 %v2427, %v2578
    %v2675 = vadd.f32 %v2431, %v2579
    %v2676 = vadd.f32 %v2433, %v2580
    %v2677 = vadd.f32 %v2435, %v2581
    %v2678 = vadd.f32 %v2437, %v2582
    %v2679 = vadd.f32 %v2441, %v2583
    %v2680 = vadd.f32 %v2443, %v2584
    %v2681 = vadd.f32 %v2445, %v2585
    %v2682 = vadd.f32 %v2447, %v2586
    %v2683 = vadd.f32 %v2451, %v2587
    %v2684 = vadd.f32 %v2453, %v2588
    %v2685 = vadd.f32 %v2455, %v2589
    %v2686 = vadd.f32 %v2457, %v2590
    %v2687 = vadd.f32 %v2461, %v2591
    %v2688 = vadd.f32 %v2463, %v2592
    %v2689 = vadd.f32 %v2465, %v2593
    %v2690 = vadd.f32 %v2467, %v2594
    %v2691 = vadd.f32 %v2471, %v2595
    %v2692 = vadd.f32 %v2473, %v2596
    %v2693 = vadd.f32 %v2475, %v2597
    %v2694 = vadd.f32 %v2477, %v2598
    %v2695 = vadd.f32 %v2481, %v2599
    %v2696 = vadd.f32 %v2483, %v2600
    %v2697 = vadd.f32 %v2485, %v2601
    %v2698 = vadd.f32 %v2487, %v2602
    %v2699 = vadd.f32 %v2491, %v2603
    %v2700 = vadd.f32 %v2493, %v2604
    %v2701 = vadd.f32 %v2495, %v2605
    %v2702 = vadd.f32 %v2497, %v2606
    %v2703 = vadd.f32 %v2501, %v2607
    %v2704 = vadd.f32 %v2503, %v2608
    %v2705 = vadd.f32 %v2505, %v2609
    %v2706 = vadd.f32 %v2507, %v2610
    %v2707 = vadd.f32 %v2511, %v2611
    %v2708 = vadd.f32 %v2513, %v2612
    %v2709 = vadd.f32 %v2515, %v2613
    %v2710 = vadd.f32 %v2517, %v2614
    %2711 = vst [vmem:[#allocation10] sm:$0xff] %v2615
    %2712 = vst [vmem:[#allocation10 + $0x8] sm:$0xff] %v2616
    %2713 = vst [vmem:[#allocation10 + $0x10] sm:$0xff] %v2617
    %2714 = vst [vmem:[#allocation10 + $0x18] sm:$0xff] %v2618
    %2715 = vst [vmem:[#allocation10 + $0x20] sm:$0xff] %v2619
    %2716 = vst [vmem:[#allocation10 + $0x28] sm:$0xff] %v2620
    %2717 = vst [vmem:[#allocation10 + $0x30] sm:$0xff] %v2621
    %2718 = vst [vmem:[#allocation10 + $0x38] sm:$0xff] %v2622
    %2719 = vst [vmem:[#allocation10 + $0x40] sm:$0xff] %v2623
    %2720 = vst [vmem:[#allocation10 + $0x48] sm:$0xff] %v2624
    %2721 = vst [vmem:[#allocation10 + $0x50] sm:$0xff] %v2625
    %2722 = vst [vmem:[#allocation10 + $0x58] sm:$0xff] %v2626
    %2723 = vst [vmem:[#allocation10 + $0x60] sm:$0xff] %v2627
    %2724 = vst [vmem:[#allocation10 + $0x68] sm:$0xff] %v2628
    %2725 = vst [vmem:[#allocation10 + $0x70] sm:$0xff] %v2629
    %2726 = vst [vmem:[#allocation10 + $0x78] sm:$0xff] %v2630
    %2727 = vst [vmem:[#allocation10 + $0x80] sm:$0xff] %v2631
    %2728 = vst [vmem:[#allocation10 + $0x88] sm:$0xff] %v2632
    %2729 = vst [vmem:[#allocation10 + $0x90] sm:$0xff] %v2633
    %2730 = vst [vmem:[#allocation10 + $0x98] sm:$0xff] %v2634
    %2731 = vst [vmem:[#allocation10 + $0xa0] sm:$0xff] %v2635
    %2732 = vst [vmem:[#allocation10 + $0xa8] sm:$0xff] %v2636
    %2733 = vst [vmem:[#allocation10 + $0xb0] sm:$0xff] %v2637
    %2734 = vst [vmem:[#allocation10 + $0xb8] sm:$0xff] %v2638
    %2735 = vst [vmem:[#allocation10 + $0xc0] sm:$0xff] %v2639
    %2736 = vst [vmem:[#allocation10 + $0xc8] sm:$0xff] %v2640
    %2737 = vst [vmem:[#allocation10 + $0xd0] sm:$0xff] %v2641
    %2738 = vst [vmem:[#allocation10 + $0xd8] sm:$0xff] %v2642
    %2739 = vst [vmem:[#allocation10 + $0xe0] sm:$0xff] %v2643
    %2740 = vst [vmem:[#allocation10 + $0xe8] sm:$0xff] %v2644
    %2741 = vst [vmem:[#allocation10 + $0xf0] sm:$0xff] %v2645
    %2742 = vst [vmem:[#allocation10 + $0xf8] sm:$0xff] %v2646
    %2743 = vst [vmem:[#allocation10 + $0x100] sm:$0xff] %v2647
    %2744 = vst [vmem:[#allocation10 + $0x108] sm:$0xff] %v2648
    %2745 = vst [vmem:[#allocation10 + $0x110] sm:$0xff] %v2649
    %2746 = vst [vmem:[#allocation10 + $0x118] sm:$0xff] %v2650
    %2747 = vst [vmem:[#allocation10 + $0x120] sm:$0xff] %v2651
    %2748 = vst [vmem:[#allocation10 + $0x128] sm:$0xff] %v2652
    %2749 = vst [vmem:[#allocation10 + $0x130] sm:$0xff] %v2653
    %2750 = vst [vmem:[#allocation10 + $0x138] sm:$0xff] %v2654
    %2751 = vst [vmem:[#allocation10 + $0x140] sm:$0xff] %v2655
    %2752 = vst [vmem:[#allocation10 + $0x148] sm:$0xff] %v2656
    %2753 = vst [vmem:[#allocation10 + $0x150] sm:$0xff] %v2657
    %2754 = vst [vmem:[#allocation10 + $0x158] sm:$0xff] %v2658
    %2755 = vst [vmem:[#allocation10 + $0x160] sm:$0xff] %v2659
    %2756 = vst [vmem:[#allocation10 + $0x168] sm:$0xff] %v2660
    %2757 = vst [vmem:[#allocation10 + $0x170] sm:$0xff] %v2661
    %2758 = vst [vmem:[#allocation10 + $0x178] sm:$0xff] %v2662
    %2759 = vst [vmem:[#allocation10 + $0x180] sm:$0xff] %v2663
    %2760 = vst [vmem:[#allocation10 + $0x188] sm:$0xff] %v2664
    %2761 = vst [vmem:[#allocation10 + $0x190] sm:$0xff] %v2665
    %2762 = vst [vmem:[#allocation10 + $0x198] sm:$0xff] %v2666
    %2763 = vst [vmem:[#allocation10 + $0x1a0] sm:$0xff] %v2667
    %2764 = vst [vmem:[#allocation10 + $0x1a8] sm:$0xff] %v2668
    %2765 = vst [vmem:[#allocation10 + $0x1b0] sm:$0xff] %v2669
    %2766 = vst [vmem:[#allocation10 + $0x1b8] sm:$0xff] %v2670
    %2767 = vst [vmem:[#allocation10 + $0x1c0] sm:$0xff] %v2671
    %2768 = vst [vmem:[#allocation10 + $0x1c8] sm:$0xff] %v2672
    %2769 = vst [vmem:[#allocation10 + $0x1d0] sm:$0xff] %v2673
    %2770 = vst [vmem:[#allocation10 + $0x1d8] sm:$0xff] %v2674
    %2771 = vst [vmem:[#allocation10 + $0x1e0] sm:$0xff] %v2675
    %2772 = vst [vmem:[#allocation10 + $0x1e8] sm:$0xff] %v2676
    %2773 = vst [vmem:[#allocation10 + $0x1f0] sm:$0xff] %v2677
    %2774 = vst [vmem:[#allocation10 + $0x1f8] sm:$0xff] %v2678
    %2775 = vst [vmem:[#allocation10 + $0x200] sm:$0xff] %v2679
    %2776 = vst [vmem:[#allocation10 + $0x208] sm:$0xff] %v2680
    %2777 = vst [vmem:[#allocation10 + $0x210] sm:$0xff] %v2681
    %2778 = vst [vmem:[#allocation10 + $0x218] sm:$0xff] %v2682
    %2779 = vst [vmem:[#allocation10 + $0x220] sm:$0xff] %v2683
    %2780 = vst [vmem:[#allocation10 + $0x228] sm:$0xff] %v2684
    %2781 = vst [vmem:[#allocation10 + $0x230] sm:$0xff] %v2685
    %2782 = vst [vmem:[#allocation10 + $0x238] sm:$0xff] %v2686
    %2783 = vst [vmem:[#allocation10 + $0x240] sm:$0xff] %v2687
    %2784 = vst [vmem:[#allocation10 + $0x248] sm:$0xff] %v2688
    %2785 = vst [vmem:[#allocation10 + $0x250] sm:$0xff] %v2689
    %2786 = vst [vmem:[#allocation10 + $0x258] sm:$0xff] %v2690
    %2787 = vst [vmem:[#allocation10 + $0x260] sm:$0xff] %v2691
    %2788 = vst [vmem:[#allocation10 + $0x268] sm:$0xff] %v2692
    %2789 = vst [vmem:[#allocation10 + $0x270] sm:$0xff] %v2693
    %2790 = vst [vmem:[#allocation10 + $0x278] sm:$0xff] %v2694
    %2791 = vst [vmem:[#allocation10 + $0x280] sm:$0xff] %v2695
    %2792 = vst [vmem:[#allocation10 + $0x288] sm:$0xff] %v2696
    %2793 = vst [vmem:[#allocation10 + $0x290] sm:$0xff] %v2697
    %2794 = vst [vmem:[#allocation10 + $0x298] sm:$0xff] %v2698
    %2795 = vst [vmem:[#allocation10 + $0x2a0] sm:$0xff] %v2699
    %2796 = vst [vmem:[#allocation10 + $0x2a8] sm:$0xff] %v2700
    %2797 = vst [vmem:[#allocation10 + $0x2b0] sm:$0xff] %v2701
    %2798 = vst [vmem:[#allocation10 + $0x2b8] sm:$0xff] %v2702
    %2799 = vst [vmem:[#allocation10 + $0x2c0] sm:$0xff] %v2703
    %2800 = vst [vmem:[#allocation10 + $0x2c8] sm:$0xff] %v2704
    %2801 = vst [vmem:[#allocation10 + $0x2d0] sm:$0xff] %v2705
    %2802 = vst [vmem:[#allocation10 + $0x2d8] sm:$0xff] %v2706
    %2803 = vst [vmem:[#allocation10 + $0x2e0] sm:$0xff] %v2707
    %2804 = vst [vmem:[#allocation10 + $0x2e8] sm:$0xff] %v2708
    %2805 = vst [vmem:[#allocation10 + $0x2f0] sm:$0xff] %v2709
    %2806 = vst [vmem:[#allocation10 + $0x2f8] sm:$0xff] %v2710
    // Predicated region
    $region34: #{tpu_custom_call.1} parent=1 // pred_check
      _
    $region35: #{tpu_custom_call.1} parent=1 // pred_check_branch
      %2808 = sbr.rel (0) target = $region37
    $region36: #{tpu_custom_call.1} parent=1 // pred_region
      %s2810 = ssub.s32 12288, 12288
      %2811 = vsyncadd [#allocation4], %s2810
      %s2812 = sshll.u32 [#allocation10], 4
      %s2813 = int_to_ptr.vmem [resolvable:$true] %s2812
      %2818 = dma.vmem_to_hbm [thread:$0]  %s2813, 12288, %s4, [#allocation4], 256, 256, 16
    $region37: #{tpu_custom_call.1} parent=1 // pred_fallthru
      _
    // Predicated region
    $region38: #{tpu_custom_call.1} parent=1 // pred_check
      _
    $region39: #{tpu_custom_call.1} parent=1 // pred_check_branch
      %2820 = sbr.rel (0) target = $region41
    $region40: #{tpu_custom_call.1} parent=1 // pred_region
      %2821 = dma.done [#allocation4], 12288
    $region41: #{tpu_custom_call.1} parent=1 // pred_fallthru
      _
    %2822 = vsyncpa [#allocation3], 1
    %2823 = vsyncpa [#allocation6], 1
    %2824 = vsyncpa [#allocation9], 1
    %2825 = vsyncpa [#allocation4], 1

</llo_original>
